<compile_context>
chip_gen: v6e
topology: v6e:2x2x1
jax: 0.10.0
libtpu: 0.0.40
codegen_flags: <defaults>
</compile_context>

<pallas_src>
import functools

import numpy as np

import jax
import jax.numpy as jnp
from jax.experimental import pallas as pl
from jax.experimental.pallas import tpu as pltpu


def _conv3x3_stats_kernel(W, need_mask, x_ref, mask_ref, wcol_ref, b3_ref,
                          y_ref, stats_ref):
    """Pass 1: 3x3 conv (pad=1) + bias, fused per-channel sum / sum-of-squares.

    x_ref:     (Cin, H*W)        one batch element; channels on sublanes,
                                 flattened spatial (lane-dense) on lanes.
    mask_ref:  (9, H*W) f32      0/1 border-validity mask per tap (constant).
    wcol_ref:  (9*Cin, Cout, 1)  wcol[(ky*3+kx)*Cin + ci, o, 0] = w3[o, ci, ky, kx]
    b3_ref:    (Cout, 1)
    y_ref:     (Cout, H*W)       conv output (pre-BN) for this tile.
    stats_ref: (2, Cout, 1)      [sum(y), sum(y*y)] over this tile.
    """
    Cin, HW = x_ref.shape
    Cout = y_ref.shape[0]

    x = x_ref[...]

    acc = jnp.zeros((Cout, HW), jnp.float32)
    t = 0
    for dy in (-1, 0, 1):
        for dx in (-1, 0, 1):
            s = dy * W + dx                       # flattened spatial shift
            shift = (-s) % HW
            # tap[c, p] = x[c, p + s]  (wrap-around zeroed by the mask below)
            tap = pltpu.roll(x, shift=shift, axis=1) if shift else x
            if need_mask[t]:
                tap = tap * mask_ref[t:t + 1, :]  # (1, HW) broadcast over Cin
            # Channel contraction as VPU broadcast FMAs (Cin, Cout are tiny).
            for ci in range(Cin):
                w_col = wcol_ref[t * Cin + ci]            # (Cout, 1)
                acc = acc + w_col * tap[ci:ci + 1, :]     # (Cout, HW)
            t += 1

    y = acc + b3_ref[...]
    y_ref[...] = y
    # Fused BatchNorm statistics (per-channel lane reductions, stay in vregs).
    stats_ref[0] = jnp.sum(y, axis=1, keepdims=True)
    stats_ref[1] = jnp.sum(y * y, axis=1, keepdims=True)


def _bn_gelu_gate_kernel(y_ref, scale_ref, shift_ref, w1_ref, b1_ref, out_ref):
    """Pass 2: BN affine (precomputed scale/shift) -> GELU -> 1x1 conv -> gate."""
    y = y_ref[...]                                        # (Cout, HW)
    yn = y * scale_ref[...] + shift_ref[...]              # (Cout, 1) broadcasts
    inv_sqrt2 = jnp.float32(0.7071067811865476)
    g = 0.5 * yn * (1.0 + jax.lax.erf(yn * inv_sqrt2))    # exact GELU
    z = jax.lax.dot_general(                              # 1x1 conv on MXU
        w1_ref[...], g,
        dimension_numbers=(((1,), (0,)), ((), ())),
        preferred_element_type=jnp.float32) + b1_ref[...]
    out_ref[...] = jax.nn.sigmoid(z) * g


@jax.jit
def fcb_forward(x_nchw, w3_oihw, b3, gamma, beta, w1_oihw, b1):
    """FCB forward. x_nchw: (N, Cin, H, W) float32 -> (N, Cout, H, W)."""
    N, Cin, H, W = x_nchw.shape
    Cout = w3_oihw.shape[0]
    HW = H * W

    # Free reshape (no transpose, no pad): spatial flattened onto lanes.
    x = x_nchw.astype(jnp.float32).reshape(N, Cin, HW)

    # (O, I, 3, 3) -> (9*Cin, Cout, 1), row = (ky*3+kx)*Cin + ci.
    wcol = jnp.transpose(w3_oihw.astype(jnp.float32), (2, 3, 1, 0)).reshape(
        9 * Cin, Cout, 1)
    b3c = b3.astype(jnp.float32).reshape(Cout, 1)

    # Trace-time-constant 0/1 border masks, one row per tap.
    idx = np.arange(HW, dtype=np.int64)
    hh = idx // W
    ww = idx % W
    masks_np = np.ones((9, HW), np.float32)
    t = 0
    for dy in (-1, 0, 1):
        for dx in (-1, 0, 1):
            valid = np.ones(HW, dtype=bool)
            if dy < 0:
                valid &= hh >= -dy
            if dy > 0:
                valid &= hh < H - dy
            if dx < 0:
                valid &= ww >= -dx
            if dx > 0:
                valid &= ww < W - dx
            masks_np[t] = valid.astype(np.float32)
            t += 1
    need_mask = tuple(bool(np.any(masks_np[t] == 0.0)) for t in range(9))
    masks = jnp.asarray(masks_np)

    cparams = pltpu.CompilerParams(
        dimension_semantics=("parallel",),
        vmem_limit_bytes=32 * 1024 * 1024)

    # ---------- pass 1: conv3x3 + bias, partial BN stats -------------------
    y, stats = pl.pallas_call(
        functools.partial(_conv3x3_stats_kernel, W, need_mask),
        grid=(N,),
        in_specs=[
            pl.BlockSpec((None, Cin, HW), lambda n: (n, 0, 0)),        # x
            pl.BlockSpec((9, HW), lambda n: (0, 0)),                   # masks
            pl.BlockSpec((9 * Cin, Cout, 1), lambda n: (0, 0, 0)),     # wcol
            pl.BlockSpec((Cout, 1), lambda n: (0, 0)),                 # b3
        ],
        out_specs=[
            pl.BlockSpec((None, Cout, HW), lambda n: (n, 0, 0)),       # y
            pl.BlockSpec((None, 2, Cout, 1), lambda n: (n, 0, 0, 0)),  # stats
        ],
        out_shape=[
            jax.ShapeDtypeStruct((N, Cout, HW), jnp.float32),
            jax.ShapeDtypeStruct((N, 2, Cout, 1), jnp.float32),
        ],
        compiler_params=cparams,
    )(x, masks, wcol, b3c)

    # ---------- finalize BatchNorm (train mode, biased var) ----------------
    # Tiny cross-tile reduction on 2*Cout floats.
    eps = jnp.float32(1e-5)
    cnt = jnp.float32(N * HW)
    tot = jnp.sum(stats, axis=0)                         # (2, Cout, 1)
    mean = tot[0] / cnt                                  # (Cout, 1)
    var = tot[1] / cnt - mean * mean
    scale = gamma.astype(jnp.float32).reshape(Cout, 1) * jax.lax.rsqrt(var + eps)
    shift = beta.astype(jnp.float32).reshape(Cout, 1) - mean * scale
    # TODO(synk): running_mean/running_var momentum update is training state,
    #             not part of the returned forward value; omitted.

    w1m = w1_oihw[:, :, 0, 0].astype(jnp.float32)        # (Cout_out, Cout_in)
    b1c = b1.astype(jnp.float32).reshape(Cout, 1)

    # ---------- pass 2: normalize + GELU + 1x1 conv + sigmoid gate ---------
    out = pl.pallas_call(
        _bn_gelu_gate_kernel,
        grid=(N,),
        in_specs=[
            pl.BlockSpec((None, Cout, HW), lambda n: (n, 0, 0)),       # y
            pl.BlockSpec((Cout, 1), lambda n: (0, 0)),                 # scale
            pl.BlockSpec((Cout, 1), lambda n: (0, 0)),                 # shift
            pl.BlockSpec((Cout, Cout), lambda n: (0, 0)),              # w1
            pl.BlockSpec((Cout, 1), lambda n: (0, 0)),                 # b1
        ],
        out_specs=pl.BlockSpec((None, Cout, HW), lambda n: (n, 0, 0)),
        out_shape=jax.ShapeDtypeStruct((N, Cout, HW), jnp.float32),
        compiler_params=cparams,
    )(y, scale, shift, w1m, b1c)

    return out.reshape(N, Cout, H, W)


def fcb_reference(x_nchw, w3_oihw, b3, gamma, beta, w1_oihw, b1):
    """Pure-JAX reference (mirrors the PyTorch forward, train-mode BN)."""
    y = jax.lax.conv_general_dilated(
        x_nchw, w3_oihw, window_strides=(1, 1), padding=((1, 1), (1, 1)),
        dimension_numbers=('NCHW', 'OIHW', 'NCHW'))
    y = y + b3[None, :, None, None]
    mean = jnp.mean(y, axis=(0, 2, 3), keepdims=True)
    var = jnp.mean((y - mean) ** 2, axis=(0, 2, 3), keepdims=True)
    yn = (y - mean) / jnp.sqrt(var + 1e-5)
    yn = yn * gamma[None, :, None, None] + beta[None, :, None, None]
    g = 0.5 * yn * (1.0 + jax.lax.erf(yn / jnp.sqrt(2.0)))
    z = jax.lax.conv_general_dilated(
        g, w1_oihw, window_strides=(1, 1), padding=((0, 0), (0, 0)),
        dimension_numbers=('NCHW', 'OIHW', 'NCHW'))
    z = z + b1[None, :, None, None]
    return jax.nn.sigmoid(z) * g


if __name__ == "__main__":
    # Small shapes consistent with the module: batch=2, Cin=4, Cout=8, 16x16.
    N, Cin, Cout, H, W = 2, 4, 8, 16, 16

    key = jax.random.PRNGKey(0)
    kx, k3, kb3, kg, kb, k1, kb1 = jax.random.split(key, 7)

    x = jax.random.normal(kx, (N, Cin, H, W), dtype=jnp.float32)
    w3 = 0.1 * jax.random.normal(k3, (Cout, Cin, 3, 3), dtype=jnp.float32)
    b3 = 0.1 * jax.random.normal(kb3, (Cout,), dtype=jnp.float32)
    gamma = 1.0 + 0.1 * jax.random.normal(kg, (Cout,), dtype=jnp.float32)
    beta = 0.1 * jax.random.normal(kb, (Cout,), dtype=jnp.float32)
    w1 = 0.1 * jax.random.normal(k1, (Cout, Cout, 1, 1), dtype=jnp.float32)
    b1 = 0.1 * jax.random.normal(kb1, (Cout,), dtype=jnp.float32)

    out = fcb_forward(x, w3, b3, gamma, beta, w1, b1)
    out = jax.block_until_ready(out)

    ref = fcb_reference(x, w3, b3, gamma, beta, w1, b1)
    assert out.shape == (N, Cout, H, W)
    assert jnp.allclose(out, ref, rtol=1e-3, atol=1e-3), (
        float(jnp.max(jnp.abs(out - ref))))

    print("KERNEL_OK")
</pallas_src>

<mosaic_0001>
module attributes {stable_mosaic.version = 11 : i64} {
  func.func @_conv3x3_stats_kernel(%arg0: i32, %arg1: memref<1x4x256xf32, #tpu.memory_space<vmem>>, %arg2: memref<9x256xf32, #tpu.memory_space<vmem>>, %arg3: memref<36x8x1xf32, #tpu.memory_space<vmem>>, %arg4: memref<8x1xf32, #tpu.memory_space<vmem>>, %arg5: memref<1x8x256xf32, #tpu.memory_space<vmem>>, %arg6: memref<1x2x8x1xf32, #tpu.memory_space<vmem>>) attributes {dimension_semantics = [#tpu.dimension_semantics<parallel>], iteration_bounds = array<i64: 2>, scalar_prefetch = 0 : i64, scratch_operands = 0 : i64, tpu.core_type = #tpu.core_type<tc>, window_params = [{transform_indices = @transform_0, window_bounds = array<i64: 1, 4, 256>}, {pipeline_mode = #tpu.pipeline_mode<synchronous>, transform_indices = @transform_1, window_bounds = array<i64: 9, 256>}, {pipeline_mode = #tpu.pipeline_mode<synchronous>, transform_indices = @transform_2, window_bounds = array<i64: 36, 8, 1>}, {pipeline_mode = #tpu.pipeline_mode<synchronous>, transform_indices = @transform_3, window_bounds = array<i64: 8, 1>}, {transform_indices = @transform_4, window_bounds = array<i64: 1, 8, 256>}, {transform_indices = @transform_5, window_bounds = array<i64: 1, 2, 8, 1>}]} {
    %c0 = arith.constant 0 : index
    %c0_0 = arith.constant 0 : index
    %c0_1 = arith.constant 0 : index
    %0 = vector.load %arg1[%c0, %c0_0, %c0_1] : memref<1x4x256xf32, #tpu.memory_space<vmem>>, vector<1x4x256xf32>
    %1 = vector.shape_cast %0 : vector<1x4x256xf32> to vector<4x256xf32>
    %cst = arith.constant 0.000000e+00 : f32
    %2 = vector.broadcast %cst : f32 to vector<8x256xf32>
    %c17_i32 = arith.constant 17 : i32
    %3 = tpu.dynamic_rotate %1 by %c17_i32 dim 1 : vector<4x256xf32>, i32 -> vector<4x256xf32>
    %c0_2 = arith.constant 0 : index
    %c0_3 = arith.constant 0 : index
    %4 = vector.load %arg2[%c0_2, %c0_3] : memref<9x256xf32, #tpu.memory_space<vmem>>, vector<1x256xf32>
    %5 = vector.broadcast %4 : vector<1x256xf32> to vector<4x256xf32>
    %6 = arith.mulf %3, %5 : vector<4x256xf32>
    %c0_4 = arith.constant 0 : index
    %c0_5 = arith.constant 0 : index
    %c0_6 = arith.constant 0 : index
    %7 = vector.load %arg3[%c0_4, %c0_5, %c0_6] : memref<36x8x1xf32, #tpu.memory_space<vmem>>, vector<1x8x1xf32>
    %8 = vector.shape_cast %7 : vector<1x8x1xf32> to vector<8x1xf32>
    %9 = vector.extract_strided_slice %6 {offsets = [0, 0], sizes = [1, 256], strides = [1, 1]} : vector<4x256xf32> to vector<1x256xf32>
    %10 = vector.broadcast %8 : vector<8x1xf32> to vector<8x256xf32>
    %11 = vector.broadcast %9 : vector<1x256xf32> to vector<8x256xf32>
    %12 = arith.mulf %10, %11 : vector<8x256xf32>
    %13 = arith.addf %2, %12 : vector<8x256xf32>
    %c1 = arith.constant 1 : index
    %c0_7 = arith.constant 0 : index
    %c0_8 = arith.constant 0 : index
    %14 = vector.load %arg3[%c1, %c0_7, %c0_8] : memref<36x8x1xf32, #tpu.memory_space<vmem>>, vector<1x8x1xf32>
    %15 = vector.shape_cast %14 : vector<1x8x1xf32> to vector<8x1xf32>
    %16 = vector.extract_strided_slice %6 {offsets = [1, 0], sizes = [1, 256], strides = [1, 1]} : vector<4x256xf32> to vector<1x256xf32>
    %17 = vector.broadcast %15 : vector<8x1xf32> to vector<8x256xf32>
    %18 = vector.broadcast %16 : vector<1x256xf32> to vector<8x256xf32>
    %19 = arith.mulf %17, %18 : vector<8x256xf32>
    %20 = arith.addf %13, %19 : vector<8x256xf32>
    %c2 = arith.constant 2 : index
    %c0_9 = arith.constant 0 : index
    %c0_10 = arith.constant 0 : index
    %21 = vector.load %arg3[%c2, %c0_9, %c0_10] : memref<36x8x1xf32, #tpu.memory_space<vmem>>, vector<1x8x1xf32>
    %22 = vector.shape_cast %21 : vector<1x8x1xf32> to vector<8x1xf32>
    %23 = vector.extract_strided_slice %6 {offsets = [2, 0], sizes = [1, 256], strides = [1, 1]} : vector<4x256xf32> to vector<1x256xf32>
    %24 = vector.broadcast %22 : vector<8x1xf32> to vector<8x256xf32>
    %25 = vector.broadcast %23 : vector<1x256xf32> to vector<8x256xf32>
    %26 = arith.mulf %24, %25 : vector<8x256xf32>
    %27 = arith.addf %20, %26 : vector<8x256xf32>
    %c3 = arith.constant 3 : index
    %c0_11 = arith.constant 0 : index
    %c0_12 = arith.constant 0 : index
    %28 = vector.load %arg3[%c3, %c0_11, %c0_12] : memref<36x8x1xf32, #tpu.memory_space<vmem>>, vector<1x8x1xf32>
    %29 = vector.shape_cast %28 : vector<1x8x1xf32> to vector<8x1xf32>
    %30 = vector.extract_strided_slice %6 {offsets = [3, 0], sizes = [1, 256], strides = [1, 1]} : vector<4x256xf32> to vector<1x256xf32>
    %31 = vector.broadcast %29 : vector<8x1xf32> to vector<8x256xf32>
    %32 = vector.broadcast %30 : vector<1x256xf32> to vector<8x256xf32>
    %33 = arith.mulf %31, %32 : vector<8x256xf32>
    %34 = arith.addf %27, %33 : vector<8x256xf32>
    %c16_i32 = arith.constant 16 : i32
    %35 = tpu.dynamic_rotate %1 by %c16_i32 dim 1 : vector<4x256xf32>, i32 -> vector<4x256xf32>
    %c1_13 = arith.constant 1 : index
    %c0_14 = arith.constant 0 : index
    %36 = vector.load %arg2[%c1_13, %c0_14] : memref<9x256xf32, #tpu.memory_space<vmem>>, vector<1x256xf32>
    %37 = vector.broadcast %36 : vector<1x256xf32> to vector<4x256xf32>
    %38 = arith.mulf %35, %37 : vector<4x256xf32>
    %c4 = arith.constant 4 : index
    %c0_15 = arith.constant 0 : index
    %c0_16 = arith.constant 0 : index
    %39 = vector.load %arg3[%c4, %c0_15, %c0_16] : memref<36x8x1xf32, #tpu.memory_space<vmem>>, vector<1x8x1xf32>
    %40 = vector.shape_cast %39 : vector<1x8x1xf32> to vector<8x1xf32>
    %41 = vector.extract_strided_slice %38 {offsets = [0, 0], sizes = [1, 256], strides = [1, 1]} : vector<4x256xf32> to vector<1x256xf32>
    %42 = vector.broadcast %40 : vector<8x1xf32> to vector<8x256xf32>
    %43 = vector.broadcast %41 : vector<1x256xf32> to vector<8x256xf32>
    %44 = arith.mulf %42, %43 : vector<8x256xf32>
    %45 = arith.addf %34, %44 : vector<8x256xf32>
    %c5 = arith.constant 5 : index
    %c0_17 = arith.constant 0 : index
    %c0_18 = arith.constant 0 : index
    %46 = vector.load %arg3[%c5, %c0_17, %c0_18] : memref<36x8x1xf32, #tpu.memory_space<vmem>>, vector<1x8x1xf32>
    %47 = vector.shape_cast %46 : vector<1x8x1xf32> to vector<8x1xf32>
    %48 = vector.extract_strided_slice %38 {offsets = [1, 0], sizes = [1, 256], strides = [1, 1]} : vector<4x256xf32> to vector<1x256xf32>
    %49 = vector.broadcast %47 : vector<8x1xf32> to vector<8x256xf32>
    %50 = vector.broadcast %48 : vector<1x256xf32> to vector<8x256xf32>
    %51 = arith.mulf %49, %50 : vector<8x256xf32>
    %52 = arith.addf %45, %51 : vector<8x256xf32>
    %c6 = arith.constant 6 : index
    %c0_19 = arith.constant 0 : index
    %c0_20 = arith.constant 0 : index
    %53 = vector.load %arg3[%c6, %c0_19, %c0_20] : memref<36x8x1xf32, #tpu.memory_space<vmem>>, vector<1x8x1xf32>
    %54 = vector.shape_cast %53 : vector<1x8x1xf32> to vector<8x1xf32>
    %55 = vector.extract_strided_slice %38 {offsets = [2, 0], sizes = [1, 256], strides = [1, 1]} : vector<4x256xf32> to vector<1x256xf32>
    %56 = vector.broadcast %54 : vector<8x1xf32> to vector<8x256xf32>
    %57 = vector.broadcast %55 : vector<1x256xf32> to vector<8x256xf32>
    %58 = arith.mulf %56, %57 : vector<8x256xf32>
    %59 = arith.addf %52, %58 : vector<8x256xf32>
    %c7 = arith.constant 7 : index
    %c0_21 = arith.constant 0 : index
    %c0_22 = arith.constant 0 : index
    %60 = vector.load %arg3[%c7, %c0_21, %c0_22] : memref<36x8x1xf32, #tpu.memory_space<vmem>>, vector<1x8x1xf32>
    %61 = vector.shape_cast %60 : vector<1x8x1xf32> to vector<8x1xf32>
    %62 = vector.extract_strided_slice %38 {offsets = [3, 0], sizes = [1, 256], strides = [1, 1]} : vector<4x256xf32> to vector<1x256xf32>
    %63 = vector.broadcast %61 : vector<8x1xf32> to vector<8x256xf32>
    %64 = vector.broadcast %62 : vector<1x256xf32> to vector<8x256xf32>
    %65 = arith.mulf %63, %64 : vector<8x256xf32>
    %66 = arith.addf %59, %65 : vector<8x256xf32>
    %c15_i32 = arith.constant 15 : i32
    %67 = tpu.dynamic_rotate %1 by %c15_i32 dim 1 : vector<4x256xf32>, i32 -> vector<4x256xf32>
    %c2_23 = arith.constant 2 : index
    %c0_24 = arith.constant 0 : index
    %68 = vector.load %arg2[%c2_23, %c0_24] : memref<9x256xf32, #tpu.memory_space<vmem>>, vector<1x256xf32>
    %69 = vector.broadcast %68 : vector<1x256xf32> to vector<4x256xf32>
    %70 = arith.mulf %67, %69 : vector<4x256xf32>
    %c8 = arith.constant 8 : index
    %c0_25 = arith.constant 0 : index
    %c0_26 = arith.constant 0 : index
    %71 = vector.load %arg3[%c8, %c0_25, %c0_26] : memref<36x8x1xf32, #tpu.memory_space<vmem>>, vector<1x8x1xf32>
    %72 = vector.shape_cast %71 : vector<1x8x1xf32> to vector<8x1xf32>
    %73 = vector.extract_strided_slice %70 {offsets = [0, 0], sizes = [1, 256], strides = [1, 1]} : vector<4x256xf32> to vector<1x256xf32>
    %74 = vector.broadcast %72 : vector<8x1xf32> to vector<8x256xf32>
    %75 = vector.broadcast %73 : vector<1x256xf32> to vector<8x256xf32>
    %76 = arith.mulf %74, %75 : vector<8x256xf32>
    %77 = arith.addf %66, %76 : vector<8x256xf32>
    %c9 = arith.constant 9 : index
    %c0_27 = arith.constant 0 : index
    %c0_28 = arith.constant 0 : index
    %78 = vector.load %arg3[%c9, %c0_27, %c0_28] : memref<36x8x1xf32, #tpu.memory_space<vmem>>, vector<1x8x1xf32>
    %79 = vector.shape_cast %78 : vector<1x8x1xf32> to vector<8x1xf32>
    %80 = vector.extract_strided_slice %70 {offsets = [1, 0], sizes = [1, 256], strides = [1, 1]} : vector<4x256xf32> to vector<1x256xf32>
    %81 = vector.broadcast %79 : vector<8x1xf32> to vector<8x256xf32>
    %82 = vector.broadcast %80 : vector<1x256xf32> to vector<8x256xf32>
    %83 = arith.mulf %81, %82 : vector<8x256xf32>
    %84 = arith.addf %77, %83 : vector<8x256xf32>
    %c10 = arith.constant 10 : index
    %c0_29 = arith.constant 0 : index
    %c0_30 = arith.constant 0 : index
    %85 = vector.load %arg3[%c10, %c0_29, %c0_30] : memref<36x8x1xf32, #tpu.memory_space<vmem>>, vector<1x8x1xf32>
    %86 = vector.shape_cast %85 : vector<1x8x1xf32> to vector<8x1xf32>
    %87 = vector.extract_strided_slice %70 {offsets = [2, 0], sizes = [1, 256], strides = [1, 1]} : vector<4x256xf32> to vector<1x256xf32>
    %88 = vector.broadcast %86 : vector<8x1xf32> to vector<8x256xf32>
    %89 = vector.broadcast %87 : vector<1x256xf32> to vector<8x256xf32>
    %90 = arith.mulf %88, %89 : vector<8x256xf32>
    %91 = arith.addf %84, %90 : vector<8x256xf32>
    %c11 = arith.constant 11 : index
    %c0_31 = arith.constant 0 : index
    %c0_32 = arith.constant 0 : index
    %92 = vector.load %arg3[%c11, %c0_31, %c0_32] : memref<36x8x1xf32, #tpu.memory_space<vmem>>, vector<1x8x1xf32>
    %93 = vector.shape_cast %92 : vector<1x8x1xf32> to vector<8x1xf32>
    %94 = vector.extract_strided_slice %70 {offsets = [3, 0], sizes = [1, 256], strides = [1, 1]} : vector<4x256xf32> to vector<1x256xf32>
    %95 = vector.broadcast %93 : vector<8x1xf32> to vector<8x256xf32>
    %96 = vector.broadcast %94 : vector<1x256xf32> to vector<8x256xf32>
    %97 = arith.mulf %95, %96 : vector<8x256xf32>
    %98 = arith.addf %91, %97 : vector<8x256xf32>
    %c1_i32 = arith.constant 1 : i32
    %99 = tpu.dynamic_rotate %1 by %c1_i32 dim 1 : vector<4x256xf32>, i32 -> vector<4x256xf32>
    %c3_33 = arith.constant 3 : index
    %c0_34 = arith.constant 0 : index
    %100 = vector.load %arg2[%c3_33, %c0_34] : memref<9x256xf32, #tpu.memory_space<vmem>>, vector<1x256xf32>
    %101 = vector.broadcast %100 : vector<1x256xf32> to vector<4x256xf32>
    %102 = arith.mulf %99, %101 : vector<4x256xf32>
    %c12 = arith.constant 12 : index
    %c0_35 = arith.constant 0 : index
    %c0_36 = arith.constant 0 : index
    %103 = vector.load %arg3[%c12, %c0_35, %c0_36] : memref<36x8x1xf32, #tpu.memory_space<vmem>>, vector<1x8x1xf32>
    %104 = vector.shape_cast %103 : vector<1x8x1xf32> to vector<8x1xf32>
    %105 = vector.extract_strided_slice %102 {offsets = [0, 0], sizes = [1, 256], strides = [1, 1]} : vector<4x256xf32> to vector<1x256xf32>
    %106 = vector.broadcast %104 : vector<8x1xf32> to vector<8x256xf32>
    %107 = vector.broadcast %105 : vector<1x256xf32> to vector<8x256xf32>
    %108 = arith.mulf %106, %107 : vector<8x256xf32>
    %109 = arith.addf %98, %108 : vector<8x256xf32>
    %c13 = arith.constant 13 : index
    %c0_37 = arith.constant 0 : index
    %c0_38 = arith.constant 0 : index
    %110 = vector.load %arg3[%c13, %c0_37, %c0_38] : memref<36x8x1xf32, #tpu.memory_space<vmem>>, vector<1x8x1xf32>
    %111 = vector.shape_cast %110 : vector<1x8x1xf32> to vector<8x1xf32>
    %112 = vector.extract_strided_slice %102 {offsets = [1, 0], sizes = [1, 256], strides = [1, 1]} : vector<4x256xf32> to vector<1x256xf32>
    %113 = vector.broadcast %111 : vector<8x1xf32> to vector<8x256xf32>
    %114 = vector.broadcast %112 : vector<1x256xf32> to vector<8x256xf32>
    %115 = arith.mulf %113, %114 : vector<8x256xf32>
    %116 = arith.addf %109, %115 : vector<8x256xf32>
    %c14 = arith.constant 14 : index
    %c0_39 = arith.constant 0 : index
    %c0_40 = arith.constant 0 : index
    %117 = vector.load %arg3[%c14, %c0_39, %c0_40] : memref<36x8x1xf32, #tpu.memory_space<vmem>>, vector<1x8x1xf32>
    %118 = vector.shape_cast %117 : vector<1x8x1xf32> to vector<8x1xf32>
    %119 = vector.extract_strided_slice %102 {offsets = [2, 0], sizes = [1, 256], strides = [1, 1]} : vector<4x256xf32> to vector<1x256xf32>
    %120 = vector.broadcast %118 : vector<8x1xf32> to vector<8x256xf32>
    %121 = vector.broadcast %119 : vector<1x256xf32> to vector<8x256xf32>
    %122 = arith.mulf %120, %121 : vector<8x256xf32>
    %123 = arith.addf %116, %122 : vector<8x256xf32>
    %c15 = arith.constant 15 : index
    %c0_41 = arith.constant 0 : index
    %c0_42 = arith.constant 0 : index
    %124 = vector.load %arg3[%c15, %c0_41, %c0_42] : memref<36x8x1xf32, #tpu.memory_space<vmem>>, vector<1x8x1xf32>
    %125 = vector.shape_cast %124 : vector<1x8x1xf32> to vector<8x1xf32>
    %126 = vector.extract_strided_slice %102 {offsets = [3, 0], sizes = [1, 256], strides = [1, 1]} : vector<4x256xf32> to vector<1x256xf32>
    %127 = vector.broadcast %125 : vector<8x1xf32> to vector<8x256xf32>
    %128 = vector.broadcast %126 : vector<1x256xf32> to vector<8x256xf32>
    %129 = arith.mulf %127, %128 : vector<8x256xf32>
    %130 = arith.addf %123, %129 : vector<8x256xf32>
    %c16 = arith.constant 16 : index
    %c0_43 = arith.constant 0 : index
    %c0_44 = arith.constant 0 : index
    %131 = vector.load %arg3[%c16, %c0_43, %c0_44] : memref<36x8x1xf32, #tpu.memory_space<vmem>>, vector<1x8x1xf32>
    %132 = vector.shape_cast %131 : vector<1x8x1xf32> to vector<8x1xf32>
    %133 = vector.extract_strided_slice %1 {offsets = [0, 0], sizes = [1, 256], strides = [1, 1]} : vector<4x256xf32> to vector<1x256xf32>
    %134 = vector.broadcast %132 : vector<8x1xf32> to vector<8x256xf32>
    %135 = vector.broadcast %133 : vector<1x256xf32> to vector<8x256xf32>
    %136 = arith.mulf %134, %135 : vector<8x256xf32>
    %137 = arith.addf %130, %136 : vector<8x256xf32>
    %c17 = arith.constant 17 : index
    %c0_45 = arith.constant 0 : index
    %c0_46 = arith.constant 0 : index
    %138 = vector.load %arg3[%c17, %c0_45, %c0_46] : memref<36x8x1xf32, #tpu.memory_space<vmem>>, vector<1x8x1xf32>
    %139 = vector.shape_cast %138 : vector<1x8x1xf32> to vector<8x1xf32>
    %140 = vector.extract_strided_slice %1 {offsets = [1, 0], sizes = [1, 256], strides = [1, 1]} : vector<4x256xf32> to vector<1x256xf32>
    %141 = vector.broadcast %139 : vector<8x1xf32> to vector<8x256xf32>
    %142 = vector.broadcast %140 : vector<1x256xf32> to vector<8x256xf32>
    %143 = arith.mulf %141, %142 : vector<8x256xf32>
    %144 = arith.addf %137, %143 : vector<8x256xf32>
    %c18 = arith.constant 18 : index
    %c0_47 = arith.constant 0 : index
    %c0_48 = arith.constant 0 : index
    %145 = vector.load %arg3[%c18, %c0_47, %c0_48] : memref<36x8x1xf32, #tpu.memory_space<vmem>>, vector<1x8x1xf32>
    %146 = vector.shape_cast %145 : vector<1x8x1xf32> to vector<8x1xf32>
    %147 = vector.extract_strided_slice %1 {offsets = [2, 0], sizes = [1, 256], strides = [1, 1]} : vector<4x256xf32> to vector<1x256xf32>
    %148 = vector.broadcast %146 : vector<8x1xf32> to vector<8x256xf32>
    %149 = vector.broadcast %147 : vector<1x256xf32> to vector<8x256xf32>
    %150 = arith.mulf %148, %149 : vector<8x256xf32>
    %151 = arith.addf %144, %150 : vector<8x256xf32>
    %c19 = arith.constant 19 : index
    %c0_49 = arith.constant 0 : index
    %c0_50 = arith.constant 0 : index
    %152 = vector.load %arg3[%c19, %c0_49, %c0_50] : memref<36x8x1xf32, #tpu.memory_space<vmem>>, vector<1x8x1xf32>
    %153 = vector.shape_cast %152 : vector<1x8x1xf32> to vector<8x1xf32>
    %154 = vector.extract_strided_slice %1 {offsets = [3, 0], sizes = [1, 256], strides = [1, 1]} : vector<4x256xf32> to vector<1x256xf32>
    %155 = vector.broadcast %153 : vector<8x1xf32> to vector<8x256xf32>
    %156 = vector.broadcast %154 : vector<1x256xf32> to vector<8x256xf32>
    %157 = arith.mulf %155, %156 : vector<8x256xf32>
    %158 = arith.addf %151, %157 : vector<8x256xf32>
    %c255_i32 = arith.constant 255 : i32
    %159 = tpu.dynamic_rotate %1 by %c255_i32 dim 1 : vector<4x256xf32>, i32 -> vector<4x256xf32>
    %c5_51 = arith.constant 5 : index
    %c0_52 = arith.constant 0 : index
    %160 = vector.load %arg2[%c5_51, %c0_52] : memref<9x256xf32, #tpu.memory_space<vmem>>, vector<1x256xf32>
    %161 = vector.broadcast %160 : vector<1x256xf32> to vector<4x256xf32>
    %162 = arith.mulf %159, %161 : vector<4x256xf32>
    %c20 = arith.constant 20 : index
    %c0_53 = arith.constant 0 : index
    %c0_54 = arith.constant 0 : index
    %163 = vector.load %arg3[%c20, %c0_53, %c0_54] : memref<36x8x1xf32, #tpu.memory_space<vmem>>, vector<1x8x1xf32>
    %164 = vector.shape_cast %163 : vector<1x8x1xf32> to vector<8x1xf32>
    %165 = vector.extract_strided_slice %162 {offsets = [0, 0], sizes = [1, 256], strides = [1, 1]} : vector<4x256xf32> to vector<1x256xf32>
    %166 = vector.broadcast %164 : vector<8x1xf32> to vector<8x256xf32>
    %167 = vector.broadcast %165 : vector<1x256xf32> to vector<8x256xf32>
    %168 = arith.mulf %166, %167 : vector<8x256xf32>
    %169 = arith.addf %158, %168 : vector<8x256xf32>
    %c21 = arith.constant 21 : index
    %c0_55 = arith.constant 0 : index
    %c0_56 = arith.constant 0 : index
    %170 = vector.load %arg3[%c21, %c0_55, %c0_56] : memref<36x8x1xf32, #tpu.memory_space<vmem>>, vector<1x8x1xf32>
    %171 = vector.shape_cast %170 : vector<1x8x1xf32> to vector<8x1xf32>
    %172 = vector.extract_strided_slice %162 {offsets = [1, 0], sizes = [1, 256], strides = [1, 1]} : vector<4x256xf32> to vector<1x256xf32>
    %173 = vector.broadcast %171 : vector<8x1xf32> to vector<8x256xf32>
    %174 = vector.broadcast %172 : vector<1x256xf32> to vector<8x256xf32>
    %175 = arith.mulf %173, %174 : vector<8x256xf32>
    %176 = arith.addf %169, %175 : vector<8x256xf32>
    %c22 = arith.constant 22 : index
    %c0_57 = arith.constant 0 : index
    %c0_58 = arith.constant 0 : index
    %177 = vector.load %arg3[%c22, %c0_57, %c0_58] : memref<36x8x1xf32, #tpu.memory_space<vmem>>, vector<1x8x1xf32>
    %178 = vector.shape_cast %177 : vector<1x8x1xf32> to vector<8x1xf32>
    %179 = vector.extract_strided_slice %162 {offsets = [2, 0], sizes = [1, 256], strides = [1, 1]} : vector<4x256xf32> to vector<1x256xf32>
    %180 = vector.broadcast %178 : vector<8x1xf32> to vector<8x256xf32>
    %181 = vector.broadcast %179 : vector<1x256xf32> to vector<8x256xf32>
    %182 = arith.mulf %180, %181 : vector<8x256xf32>
    %183 = arith.addf %176, %182 : vector<8x256xf32>
    %c23 = arith.constant 23 : index
    %c0_59 = arith.constant 0 : index
    %c0_60 = arith.constant 0 : index
    %184 = vector.load %arg3[%c23, %c0_59, %c0_60] : memref<36x8x1xf32, #tpu.memory_space<vmem>>, vector<1x8x1xf32>
    %185 = vector.shape_cast %184 : vector<1x8x1xf32> to vector<8x1xf32>
    %186 = vector.extract_strided_slice %162 {offsets = [3, 0], sizes = [1, 256], strides = [1, 1]} : vector<4x256xf32> to vector<1x256xf32>
    %187 = vector.broadcast %185 : vector<8x1xf32> to vector<8x256xf32>
    %188 = vector.broadcast %186 : vector<1x256xf32> to vector<8x256xf32>
    %189 = arith.mulf %187, %188 : vector<8x256xf32>
    %190 = arith.addf %183, %189 : vector<8x256xf32>
    %c241_i32 = arith.constant 241 : i32
    %191 = tpu.dynamic_rotate %1 by %c241_i32 dim 1 : vector<4x256xf32>, i32 -> vector<4x256xf32>
    %c6_61 = arith.constant 6 : index
    %c0_62 = arith.constant 0 : index
    %192 = vector.load %arg2[%c6_61, %c0_62] : memref<9x256xf32, #tpu.memory_space<vmem>>, vector<1x256xf32>
    %193 = vector.broadcast %192 : vector<1x256xf32> to vector<4x256xf32>
    %194 = arith.mulf %191, %193 : vector<4x256xf32>
    %c24 = arith.constant 24 : index
    %c0_63 = arith.constant 0 : index
    %c0_64 = arith.constant 0 : index
    %195 = vector.load %arg3[%c24, %c0_63, %c0_64] : memref<36x8x1xf32, #tpu.memory_space<vmem>>, vector<1x8x1xf32>
    %196 = vector.shape_cast %195 : vector<1x8x1xf32> to vector<8x1xf32>
    %197 = vector.extract_strided_slice %194 {offsets = [0, 0], sizes = [1, 256], strides = [1, 1]} : vector<4x256xf32> to vector<1x256xf32>
    %198 = vector.broadcast %196 : vector<8x1xf32> to vector<8x256xf32>
    %199 = vector.broadcast %197 : vector<1x256xf32> to vector<8x256xf32>
    %200 = arith.mulf %198, %199 : vector<8x256xf32>
    %201 = arith.addf %190, %200 : vector<8x256xf32>
    %c25 = arith.constant 25 : index
    %c0_65 = arith.constant 0 : index
    %c0_66 = arith.constant 0 : index
    %202 = vector.load %arg3[%c25, %c0_65, %c0_66] : memref<36x8x1xf32, #tpu.memory_space<vmem>>, vector<1x8x1xf32>
    %203 = vector.shape_cast %202 : vector<1x8x1xf32> to vector<8x1xf32>
    %204 = vector.extract_strided_slice %194 {offsets = [1, 0], sizes = [1, 256], strides = [1, 1]} : vector<4x256xf32> to vector<1x256xf32>
    %205 = vector.broadcast %203 : vector<8x1xf32> to vector<8x256xf32>
    %206 = vector.broadcast %204 : vector<1x256xf32> to vector<8x256xf32>
    %207 = arith.mulf %205, %206 : vector<8x256xf32>
    %208 = arith.addf %201, %207 : vector<8x256xf32>
    %c26 = arith.constant 26 : index
    %c0_67 = arith.constant 0 : index
    %c0_68 = arith.constant 0 : index
    %209 = vector.load %arg3[%c26, %c0_67, %c0_68] : memref<36x8x1xf32, #tpu.memory_space<vmem>>, vector<1x8x1xf32>
    %210 = vector.shape_cast %209 : vector<1x8x1xf32> to vector<8x1xf32>
    %211 = vector.extract_strided_slice %194 {offsets = [2, 0], sizes = [1, 256], strides = [1, 1]} : vector<4x256xf32> to vector<1x256xf32>
    %212 = vector.broadcast %210 : vector<8x1xf32> to vector<8x256xf32>
    %213 = vector.broadcast %211 : vector<1x256xf32> to vector<8x256xf32>
    %214 = arith.mulf %212, %213 : vector<8x256xf32>
    %215 = arith.addf %208, %214 : vector<8x256xf32>
    %c27 = arith.constant 27 : index
    %c0_69 = arith.constant 0 : index
    %c0_70 = arith.constant 0 : index
    %216 = vector.load %arg3[%c27, %c0_69, %c0_70] : memref<36x8x1xf32, #tpu.memory_space<vmem>>, vector<1x8x1xf32>
    %217 = vector.shape_cast %216 : vector<1x8x1xf32> to vector<8x1xf32>
    %218 = vector.extract_strided_slice %194 {offsets = [3, 0], sizes = [1, 256], strides = [1, 1]} : vector<4x256xf32> to vector<1x256xf32>
    %219 = vector.broadcast %217 : vector<8x1xf32> to vector<8x256xf32>
    %220 = vector.broadcast %218 : vector<1x256xf32> to vector<8x256xf32>
    %221 = arith.mulf %219, %220 : vector<8x256xf32>
    %222 = arith.addf %215, %221 : vector<8x256xf32>
    %c240_i32 = arith.constant 240 : i32
    %223 = tpu.dynamic_rotate %1 by %c240_i32 dim 1 : vector<4x256xf32>, i32 -> vector<4x256xf32>
    %c7_71 = arith.constant 7 : index
    %c0_72 = arith.constant 0 : index
    %224 = vector.load %arg2[%c7_71, %c0_72] : memref<9x256xf32, #tpu.memory_space<vmem>>, vector<1x256xf32>
    %225 = vector.broadcast %224 : vector<1x256xf32> to vector<4x256xf32>
    %226 = arith.mulf %223, %225 : vector<4x256xf32>
    %c28 = arith.constant 28 : index
    %c0_73 = arith.constant 0 : index
    %c0_74 = arith.constant 0 : index
    %227 = vector.load %arg3[%c28, %c0_73, %c0_74] : memref<36x8x1xf32, #tpu.memory_space<vmem>>, vector<1x8x1xf32>
    %228 = vector.shape_cast %227 : vector<1x8x1xf32> to vector<8x1xf32>
    %229 = vector.extract_strided_slice %226 {offsets = [0, 0], sizes = [1, 256], strides = [1, 1]} : vector<4x256xf32> to vector<1x256xf32>
    %230 = vector.broadcast %228 : vector<8x1xf32> to vector<8x256xf32>
    %231 = vector.broadcast %229 : vector<1x256xf32> to vector<8x256xf32>
    %232 = arith.mulf %230, %231 : vector<8x256xf32>
    %233 = arith.addf %222, %232 : vector<8x256xf32>
    %c29 = arith.constant 29 : index
    %c0_75 = arith.constant 0 : index
    %c0_76 = arith.constant 0 : index
    %234 = vector.load %arg3[%c29, %c0_75, %c0_76] : memref<36x8x1xf32, #tpu.memory_space<vmem>>, vector<1x8x1xf32>
    %235 = vector.shape_cast %234 : vector<1x8x1xf32> to vector<8x1xf32>
    %236 = vector.extract_strided_slice %226 {offsets = [1, 0], sizes = [1, 256], strides = [1, 1]} : vector<4x256xf32> to vector<1x256xf32>
    %237 = vector.broadcast %235 : vector<8x1xf32> to vector<8x256xf32>
    %238 = vector.broadcast %236 : vector<1x256xf32> to vector<8x256xf32>
    %239 = arith.mulf %237, %238 : vector<8x256xf32>
    %240 = arith.addf %233, %239 : vector<8x256xf32>
    %c30 = arith.constant 30 : index
    %c0_77 = arith.constant 0 : index
    %c0_78 = arith.constant 0 : index
    %241 = vector.load %arg3[%c30, %c0_77, %c0_78] : memref<36x8x1xf32, #tpu.memory_space<vmem>>, vector<1x8x1xf32>
    %242 = vector.shape_cast %241 : vector<1x8x1xf32> to vector<8x1xf32>
    %243 = vector.extract_strided_slice %226 {offsets = [2, 0], sizes = [1, 256], strides = [1, 1]} : vector<4x256xf32> to vector<1x256xf32>
    %244 = vector.broadcast %242 : vector<8x1xf32> to vector<8x256xf32>
    %245 = vector.broadcast %243 : vector<1x256xf32> to vector<8x256xf32>
    %246 = arith.mulf %244, %245 : vector<8x256xf32>
    %247 = arith.addf %240, %246 : vector<8x256xf32>
    %c31 = arith.constant 31 : index
    %c0_79 = arith.constant 0 : index
    %c0_80 = arith.constant 0 : index
    %248 = vector.load %arg3[%c31, %c0_79, %c0_80] : memref<36x8x1xf32, #tpu.memory_space<vmem>>, vector<1x8x1xf32>
    %249 = vector.shape_cast %248 : vector<1x8x1xf32> to vector<8x1xf32>
    %250 = vector.extract_strided_slice %226 {offsets = [3, 0], sizes = [1, 256], strides = [1, 1]} : vector<4x256xf32> to vector<1x256xf32>
    %251 = vector.broadcast %249 : vector<8x1xf32> to vector<8x256xf32>
    %252 = vector.broadcast %250 : vector<1x256xf32> to vector<8x256xf32>
    %253 = arith.mulf %251, %252 : vector<8x256xf32>
    %254 = arith.addf %247, %253 : vector<8x256xf32>
    %c239_i32 = arith.constant 239 : i32
    %255 = tpu.dynamic_rotate %1 by %c239_i32 dim 1 : vector<4x256xf32>, i32 -> vector<4x256xf32>
    %c8_81 = arith.constant 8 : index
    %c0_82 = arith.constant 0 : index
    %256 = vector.load %arg2[%c8_81, %c0_82] : memref<9x256xf32, #tpu.memory_space<vmem>>, vector<1x256xf32>
    %257 = vector.broadcast %256 : vector<1x256xf32> to vector<4x256xf32>
    %258 = arith.mulf %255, %257 : vector<4x256xf32>
    %c32 = arith.constant 32 : index
    %c0_83 = arith.constant 0 : index
    %c0_84 = arith.constant 0 : index
    %259 = vector.load %arg3[%c32, %c0_83, %c0_84] : memref<36x8x1xf32, #tpu.memory_space<vmem>>, vector<1x8x1xf32>
    %260 = vector.shape_cast %259 : vector<1x8x1xf32> to vector<8x1xf32>
    %261 = vector.extract_strided_slice %258 {offsets = [0, 0], sizes = [1, 256], strides = [1, 1]} : vector<4x256xf32> to vector<1x256xf32>
    %262 = vector.broadcast %260 : vector<8x1xf32> to vector<8x256xf32>
    %263 = vector.broadcast %261 : vector<1x256xf32> to vector<8x256xf32>
    %264 = arith.mulf %262, %263 : vector<8x256xf32>
    %265 = arith.addf %254, %264 : vector<8x256xf32>
    %c33 = arith.constant 33 : index
    %c0_85 = arith.constant 0 : index
    %c0_86 = arith.constant 0 : index
    %266 = vector.load %arg3[%c33, %c0_85, %c0_86] : memref<36x8x1xf32, #tpu.memory_space<vmem>>, vector<1x8x1xf32>
    %267 = vector.shape_cast %266 : vector<1x8x1xf32> to vector<8x1xf32>
    %268 = vector.extract_strided_slice %258 {offsets = [1, 0], sizes = [1, 256], strides = [1, 1]} : vector<4x256xf32> to vector<1x256xf32>
    %269 = vector.broadcast %267 : vector<8x1xf32> to vector<8x256xf32>
    %270 = vector.broadcast %268 : vector<1x256xf32> to vector<8x256xf32>
    %271 = arith.mulf %269, %270 : vector<8x256xf32>
    %272 = arith.addf %265, %271 : vector<8x256xf32>
    %c34 = arith.constant 34 : index
    %c0_87 = arith.constant 0 : index
    %c0_88 = arith.constant 0 : index
    %273 = vector.load %arg3[%c34, %c0_87, %c0_88] : memref<36x8x1xf32, #tpu.memory_space<vmem>>, vector<1x8x1xf32>
    %274 = vector.shape_cast %273 : vector<1x8x1xf32> to vector<8x1xf32>
    %275 = vector.extract_strided_slice %258 {offsets = [2, 0], sizes = [1, 256], strides = [1, 1]} : vector<4x256xf32> to vector<1x256xf32>
    %276 = vector.broadcast %274 : vector<8x1xf32> to vector<8x256xf32>
    %277 = vector.broadcast %275 : vector<1x256xf32> to vector<8x256xf32>
    %278 = arith.mulf %276, %277 : vector<8x256xf32>
    %279 = arith.addf %272, %278 : vector<8x256xf32>
    %c35 = arith.constant 35 : index
    %c0_89 = arith.constant 0 : index
    %c0_90 = arith.constant 0 : index
    %280 = vector.load %arg3[%c35, %c0_89, %c0_90] : memref<36x8x1xf32, #tpu.memory_space<vmem>>, vector<1x8x1xf32>
    %281 = vector.shape_cast %280 : vector<1x8x1xf32> to vector<8x1xf32>
    %282 = vector.extract_strided_slice %258 {offsets = [3, 0], sizes = [1, 256], strides = [1, 1]} : vector<4x256xf32> to vector<1x256xf32>
    %283 = vector.broadcast %281 : vector<8x1xf32> to vector<8x256xf32>
    %284 = vector.broadcast %282 : vector<1x256xf32> to vector<8x256xf32>
    %285 = arith.mulf %283, %284 : vector<8x256xf32>
    %286 = arith.addf %279, %285 : vector<8x256xf32>
    %c0_91 = arith.constant 0 : index
    %c0_92 = arith.constant 0 : index
    %287 = vector.load %arg4[%c0_91, %c0_92] : memref<8x1xf32, #tpu.memory_space<vmem>>, vector<8x1xf32>
    %288 = vector.broadcast %287 : vector<8x1xf32> to vector<8x256xf32>
    %289 = arith.addf %286, %288 : vector<8x256xf32>
    %c0_93 = arith.constant 0 : index
    %c0_94 = arith.constant 0 : index
    %c0_95 = arith.constant 0 : index
    %290 = vector.load %arg5[%c0_93, %c0_94, %c0_95] : memref<1x8x256xf32, #tpu.memory_space<vmem>>, vector<1x8x256xf32>
    %291 = vector.shape_cast %290 : vector<1x8x256xf32> to vector<8x256xf32>
    %292 = vector.shape_cast %289 : vector<8x256xf32> to vector<1x8x256xf32>
    tpu.vector_store %arg5[%c0_93, %c0_94, %c0_95], %292 {strides = array<i32>} : memref<1x8x256xf32, #tpu.memory_space<vmem>>, vector<1x8x256xf32>,
    %cst_96 = arith.constant dense<0.000000e+00> : vector<8xf32>
    %293 = vector.multi_reduction <add>, %289, %cst_96 [1] : vector<8x256xf32> to vector<8xf32>
    %294 = vector.shape_cast %293 : vector<8xf32> to vector<8x1xf32>
    %c0_97 = arith.constant 0 : index
    %c0_98 = arith.constant 0 : index
    %c0_99 = arith.constant 0 : index
    %c0_100 = arith.constant 0 : index
    %295 = vector.load %arg6[%c0_97, %c0_98, %c0_99, %c0_100] : memref<1x2x8x1xf32, #tpu.memory_space<vmem>>, vector<1x1x8x1xf32>
    %296 = vector.shape_cast %295 : vector<1x1x8x1xf32> to vector<8x1xf32>
    %297 = vector.shape_cast %294 : vector<8x1xf32> to vector<1x1x8x1xf32>
    tpu.vector_store %arg6[%c0_97, %c0_98, %c0_99, %c0_100], %297 {strides = array<i32>} : memref<1x2x8x1xf32, #tpu.memory_space<vmem>>, vector<1x1x8x1xf32>,
    %298 = arith.mulf %289, %289 : vector<8x256xf32>
    %cst_101 = arith.constant dense<0.000000e+00> : vector<8xf32>
    %299 = vector.multi_reduction <add>, %298, %cst_101 [1] : vector<8x256xf32> to vector<8xf32>
    %300 = vector.shape_cast %299 : vector<8xf32> to vector<8x1xf32>
    %c0_102 = arith.constant 0 : index
    %c1_103 = arith.constant 1 : index
    %c0_104 = arith.constant 0 : index
    %c0_105 = arith.constant 0 : index
    %301 = vector.load %arg6[%c0_102, %c1_103, %c0_104, %c0_105] : memref<1x2x8x1xf32, #tpu.memory_space<vmem>>, vector<1x1x8x1xf32>
    %302 = vector.shape_cast %301 : vector<1x1x8x1xf32> to vector<8x1xf32>
    %303 = vector.shape_cast %300 : vector<8x1xf32> to vector<1x1x8x1xf32>
    tpu.vector_store %arg6[%c0_102, %c1_103, %c0_104, %c0_105], %303 {strides = array<i32>} : memref<1x2x8x1xf32, #tpu.memory_space<vmem>>, vector<1x1x8x1xf32>,
    return
  }
  func.func @transform_0(%arg0: i32) -> (i32, i32, i32) {
    %c0_i32 = arith.constant 0 : i32
    %c0_i32_0 = arith.constant 0 : i32
    %c0_i32_1 = arith.constant 0 : i32
    return %arg0, %c0_i32, %c0_i32_0 : i32, i32, i32
  }
  func.func @transform_1(%arg0: i32) -> (i32, i32) {
    %c0_i32 = arith.constant 0 : i32
    %c0_i32_0 = arith.constant 0 : i32
    %c0_i32_1 = arith.constant 0 : i32
    return %c0_i32, %c0_i32_0 : i32, i32
  }
  func.func @transform_2(%arg0: i32) -> (i32, i32, i32) {
    %c0_i32 = arith.constant 0 : i32
    %c0_i32_0 = arith.constant 0 : i32
    %c0_i32_1 = arith.constant 0 : i32
    %c0_i32_2 = arith.constant 0 : i32
    return %c0_i32, %c0_i32_0, %c0_i32_1 : i32, i32, i32
  }
  func.func @transform_3(%arg0: i32) -> (i32, i32) {
    %c0_i32 = arith.constant 0 : i32
    %c0_i32_0 = arith.constant 0 : i32
    %c0_i32_1 = arith.constant 0 : i32
    return %c0_i32, %c0_i32_0 : i32, i32
  }
  func.func @transform_4(%arg0: i32) -> (i32, i32, i32) {
    %c0_i32 = arith.constant 0 : i32
    %c0_i32_0 = arith.constant 0 : i32
    %c0_i32_1 = arith.constant 0 : i32
    return %arg0, %c0_i32, %c0_i32_0 : i32, i32, i32
  }
  func.func @transform_5(%arg0: i32) -> (i32, i32, i32, i32) {
    %c0_i32 = arith.constant 0 : i32
    %c0_i32_0 = arith.constant 0 : i32
    %c0_i32_1 = arith.constant 0 : i32
    %c0_i32_2 = arith.constant 0 : i32
    return %arg0, %c0_i32, %c0_i32_0, %c0_i32_1 : i32, i32, i32, i32
  }
}

module attributes {stable_mosaic.version = 11 : i64} {
  func.func @_bn_gelu_gate_kernel(%arg0: i32, %arg1: memref<1x8x256xf32, #tpu.memory_space<vmem>>, %arg2: memref<8x1xf32, #tpu.memory_space<vmem>>, %arg3: memref<8x1xf32, #tpu.memory_space<vmem>>, %arg4: memref<8x8xf32, #tpu.memory_space<vmem>>, %arg5: memref<8x1xf32, #tpu.memory_space<vmem>>, %arg6: memref<1x8x256xf32, #tpu.memory_space<vmem>>) attributes {dimension_semantics = [#tpu.dimension_semantics<parallel>], iteration_bounds = array<i64: 2>, scalar_prefetch = 0 : i64, scratch_operands = 0 : i64, tpu.core_type = #tpu.core_type<tc>, window_params = [{transform_indices = @transform_0, window_bounds = array<i64: 1, 8, 256>}, {pipeline_mode = #tpu.pipeline_mode<synchronous>, transform_indices = @transform_1, window_bounds = array<i64: 8, 1>}, {pipeline_mode = #tpu.pipeline_mode<synchronous>, transform_indices = @transform_2, window_bounds = array<i64: 8, 1>}, {pipeline_mode = #tpu.pipeline_mode<synchronous>, transform_indices = @transform_3, window_bounds = array<i64: 8, 8>}, {pipeline_mode = #tpu.pipeline_mode<synchronous>, transform_indices = @transform_4, window_bounds = array<i64: 8, 1>}, {transform_indices = @transform_5, window_bounds = array<i64: 1, 8, 256>}]} {
    %c0 = arith.constant 0 : index
    %c0_0 = arith.constant 0 : index
    %c0_1 = arith.constant 0 : index
    %0 = vector.load %arg1[%c0, %c0_0, %c0_1] : memref<1x8x256xf32, #tpu.memory_space<vmem>>, vector<1x8x256xf32>
    %1 = vector.shape_cast %0 : vector<1x8x256xf32> to vector<8x256xf32>
    %c0_2 = arith.constant 0 : index
    %c0_3 = arith.constant 0 : index
    %2 = vector.load %arg2[%c0_2, %c0_3] : memref<8x1xf32, #tpu.memory_space<vmem>>, vector<8x1xf32>
    %3 = vector.broadcast %2 : vector<8x1xf32> to vector<8x256xf32>
    %4 = arith.mulf %1, %3 : vector<8x256xf32>
    %c0_4 = arith.constant 0 : index
    %c0_5 = arith.constant 0 : index
    %5 = vector.load %arg3[%c0_4, %c0_5] : memref<8x1xf32, #tpu.memory_space<vmem>>, vector<8x1xf32>
    %6 = vector.broadcast %5 : vector<8x1xf32> to vector<8x256xf32>
    %7 = arith.addf %4, %6 : vector<8x256xf32>
    %cst = arith.constant 5.000000e-01 : f32
    %8 = vector.broadcast %cst : f32 to vector<8x256xf32>
    %9 = arith.mulf %8, %7 : vector<8x256xf32>
    %cst_6 = arith.constant 0.707106769 : f32
    %10 = vector.broadcast %cst_6 : f32 to vector<8x256xf32>
    %11 = arith.mulf %7, %10 : vector<8x256xf32>
    %12 = math.erf %11 : vector<8x256xf32>
    %cst_7 = arith.constant 1.000000e+00 : f32
    %13 = vector.broadcast %cst_7 : f32 to vector<8x256xf32>
    %14 = arith.addf %13, %12 : vector<8x256xf32>
    %15 = arith.mulf %9, %14 : vector<8x256xf32>
    %c0_8 = arith.constant 0 : index
    %c0_9 = arith.constant 0 : index
    %16 = vector.load %arg4[%c0_8, %c0_9] : memref<8x8xf32, #tpu.memory_space<vmem>>, vector<8x8xf32>
    %cst_10 = arith.constant dense<0.000000e+00> : vector<8x256xf32>
    %17 = tpu.matmul %16, %15, %cst_10 {dimension_numbers = #tpu.dot_dimension_numbers<[1], [0], [0], [1], [0, 0, 1, 1], [], []>} : vector<8x8xf32>, vector<8x256xf32>, vector<8x256xf32> -> vector<8x256xf32>
    %c0_11 = arith.constant 0 : index
    %c0_12 = arith.constant 0 : index
    %18 = vector.load %arg5[%c0_11, %c0_12] : memref<8x1xf32, #tpu.memory_space<vmem>>, vector<8x1xf32>
    %19 = vector.broadcast %18 : vector<8x1xf32> to vector<8x256xf32>
    %20 = arith.addf %17, %19 : vector<8x256xf32>
    %21 = arith.negf %20 : vector<8x256xf32>
    %22 = math.exp %21 : vector<8x256xf32>
    %cst_13 = arith.constant 1.000000e+00 : f32
    %23 = vector.broadcast %cst_13 : f32 to vector<8x256xf32>
    %24 = arith.addf %23, %22 : vector<8x256xf32>
    %25 = arith.divf %23, %24 : vector<8x256xf32>
    %26 = arith.mulf %25, %15 : vector<8x256xf32>
    %c0_14 = arith.constant 0 : index
    %c0_15 = arith.constant 0 : index
    %c0_16 = arith.constant 0 : index
    %27 = vector.load %arg6[%c0_14, %c0_15, %c0_16] : memref<1x8x256xf32, #tpu.memory_space<vmem>>, vector<1x8x256xf32>
    %28 = vector.shape_cast %27 : vector<1x8x256xf32> to vector<8x256xf32>
    %29 = vector.shape_cast %26 : vector<8x256xf32> to vector<1x8x256xf32>
    tpu.vector_store %arg6[%c0_14, %c0_15, %c0_16], %29 {strides = array<i32>} : memref<1x8x256xf32, #tpu.memory_space<vmem>>, vector<1x8x256xf32>,
    return
  }
  func.func @transform_0(%arg0: i32) -> (i32, i32, i32) {
    %c0_i32 = arith.constant 0 : i32
    %c0_i32_0 = arith.constant 0 : i32
    %c0_i32_1 = arith.constant 0 : i32
    return %arg0, %c0_i32, %c0_i32_0 : i32, i32, i32
  }
  func.func @transform_1(%arg0: i32) -> (i32, i32) {
    %c0_i32 = arith.constant 0 : i32
    %c0_i32_0 = arith.constant 0 : i32
    %c0_i32_1 = arith.constant 0 : i32
    return %c0_i32, %c0_i32_0 : i32, i32
  }
  func.func @transform_2(%arg0: i32) -> (i32, i32) {
    %c0_i32 = arith.constant 0 : i32
    %c0_i32_0 = arith.constant 0 : i32
    %c0_i32_1 = arith.constant 0 : i32
    return %c0_i32, %c0_i32_0 : i32, i32
  }
  func.func @transform_3(%arg0: i32) -> (i32, i32) {
    %c0_i32 = arith.constant 0 : i32
    %c0_i32_0 = arith.constant 0 : i32
    %c0_i32_1 = arith.constant 0 : i32
    return %c0_i32, %c0_i32_0 : i32, i32
  }
  func.func @transform_4(%arg0: i32) -> (i32, i32) {
    %c0_i32 = arith.constant 0 : i32
    %c0_i32_0 = arith.constant 0 : i32
    %c0_i32_1 = arith.constant 0 : i32
    return %c0_i32, %c0_i32_0 : i32, i32
  }
  func.func @transform_5(%arg0: i32) -> (i32, i32, i32) {
    %c0_i32 = arith.constant 0 : i32
    %c0_i32_0 = arith.constant 0 : i32
    %c0_i32_1 = arith.constant 0 : i32
    return %arg0, %c0_i32, %c0_i32_0 : i32, i32, i32
  }
}

</mosaic_0001>

<llo_original>
// kernel: fcb_forward.3
$region0: #{fcb_forward.3}
  #allocation0 [shape = 'u32[]', space=smem, size = 0x4, offset = 0x4, fixed_abs, tag = 'smem constant byte address 0x4 - core index']
  #allocation1 [shape = 'u32[144,128]{1,0:T(1,128)}', space=vmem, size = 0x12000, scoped, tag = 'internal scratch']
  %s0 = inlined_call_operand.vmem [shape: f32[2,8,256], index: 0, kind: input, shape index: {}]
  %s1 = inlined_call_operand.vmem [shape: f32[8,1], index: 1, kind: input, shape index: {}]
  %s2 = inlined_call_operand.vmem [shape: f32[8,1], index: 2, kind: input, shape index: {}]
  %s3 = inlined_call_operand.vmem [shape: f32[8,8], index: 3, kind: input, shape index: {}]
  %s4 = inlined_call_operand.vmem [shape: f32[8,1], index: 4, kind: input, shape index: {}]
  %s5 = inlined_call_operand.vmem [shape: f32[2,8,256], index: 5, kind: output, shape index: {}]
  %s6 = sld [smem:[#allocation0]]
  $region53: #{fcb_forward.3} parent=0
    _
  %s8 = ssub.s32 1, %s6
  %s9 = scalar_select 0, %s8, %s6
  loop: start=0, step=1, limit=4
  $region2: #{fcb_forward.3} parent=0 // loop_pre_header
    _
  $region3: #{fcb_forward.3} parent=0 // loop_header
    %s11 = sphi 0, %s15
    %p12 = scmp.ge.s32.totalorder %s11, 4
    %s21 = sphi 0, %s23
    %s24 = sphi 0, %s21
    %s25 = sphi 0, %s24
    %s41 = sphi 0, %s25
    %s45 = sphi 0, %s45
    %s47 = sphi 0, %s45
    %s48 = sphi 0, %s47
    %s62 = sphi 0, %s48
    %s66 = sphi 0, %s66
    %s68 = sphi 0, %s66
    %s69 = sphi 0, %s68
    %s83 = sphi 0, %s69
    %s87 = sphi 0, %s87
    %s89 = sphi 0, %s87
    %s90 = sphi 0, %s89
    %s104 = sphi 0, %s90
    %s108 = sphi 0, %s108
    %s110 = sphi 0, %s108
    %s111 = sphi 0, %s110
    %s125 = sphi 0, %s111
    %s131 = sphi 0, %s133
    %s134 = sphi 0, %s131
    %s135 = sphi 0, %s134
    %s151 = sphi 0, %s135
  $region4: #{fcb_forward.3} parent=0 // loop_header_branch
    %14 = sbr.rel (%p12) target = $region8
  $region5: #{fcb_forward.3} parent=0 // loop_body
    %s16 = ssub.s32 %s11, 1
    %s17 = ssub.s32 %s11, 2
    %s18 = sadd.s32 %s11, 1
    %s19 = ssub.s32 %s11, %s18
    %p20 = scmp.eq.s32.totalorder %s19, 0
    %s22 = sadd.s32 %s21, 1
    %s23 = scalar_select %p20, %s21, %s22
    %p26 = pneg %p20
    %p27 = scmp.eq.s32.totalorder %s11, 1
    %p28 = por %p26, %p27
    %p29 = scmp.ne.s32.totalorder %s21, %s24
    %p30 = scmp.eq.s32.totalorder %s11, 0
    %p31 = por %p29, %p30
    %p32 = scmp.ne.s32.totalorder %s21, %s24
    %p33 = scmp.eq.s32.totalorder %s16, 1
    %p34 = por %p32, %p33
    %p35 = scmp.ne.s32.totalorder %s24, %s25
    %p36 = scmp.eq.s32.totalorder %s16, 0
    %p37 = por %p35, %p36
    %p38 = scmp.ne.s32.totalorder %s24, %s25
    %p39 = scmp.eq.s32.totalorder %s17, 1
    %p40 = por %p38, %p39
    %p42 = scmp.ne.s32.totalorder %s25, %s41
    %p43 = scmp.eq.s32.totalorder %s17, 0
    %p44 = por %p42, %p43
    %s46 = sadd.s32 %s45, 1
    %p49 = scmp.eq.s32.totalorder %s11, 1
    %p50 = scmp.ne.s32.totalorder %s45, %s47
    %p51 = scmp.eq.s32.totalorder %s11, 0
    %p52 = por %p50, %p51
    %p53 = scmp.ne.s32.totalorder %s45, %s47
    %p54 = scmp.eq.s32.totalorder %s16, 1
    %p55 = por %p53, %p54
    %p56 = scmp.ne.s32.totalorder %s47, %s48
    %p57 = scmp.eq.s32.totalorder %s16, 0
    %p58 = por %p56, %p57
    %p59 = scmp.ne.s32.totalorder %s47, %s48
    %p60 = scmp.eq.s32.totalorder %s17, 1
    %p61 = por %p59, %p60
    %p63 = scmp.ne.s32.totalorder %s48, %s62
    %p64 = scmp.eq.s32.totalorder %s17, 0
    %p65 = por %p63, %p64
    %s67 = sadd.s32 %s66, 1
    %p70 = scmp.eq.s32.totalorder %s11, 1
    %p71 = scmp.ne.s32.totalorder %s66, %s68
    %p72 = scmp.eq.s32.totalorder %s11, 0
    %p73 = por %p71, %p72
    %p74 = scmp.ne.s32.totalorder %s66, %s68
    %p75 = scmp.eq.s32.totalorder %s16, 1
    %p76 = por %p74, %p75
    %p77 = scmp.ne.s32.totalorder %s68, %s69
    %p78 = scmp.eq.s32.totalorder %s16, 0
    %p79 = por %p77, %p78
    %p80 = scmp.ne.s32.totalorder %s68, %s69
    %p81 = scmp.eq.s32.totalorder %s17, 1
    %p82 = por %p80, %p81
    %p84 = scmp.ne.s32.totalorder %s69, %s83
    %p85 = scmp.eq.s32.totalorder %s17, 0
    %p86 = por %p84, %p85
    %s88 = sadd.s32 %s87, 1
    %p91 = scmp.eq.s32.totalorder %s11, 1
    %p92 = scmp.ne.s32.totalorder %s87, %s89
    %p93 = scmp.eq.s32.totalorder %s11, 0
    %p94 = por %p92, %p93
    %p95 = scmp.ne.s32.totalorder %s87, %s89
    %p96 = scmp.eq.s32.totalorder %s16, 1
    %p97 = por %p95, %p96
    %p98 = scmp.ne.s32.totalorder %s89, %s90
    %p99 = scmp.eq.s32.totalorder %s16, 0
    %p100 = por %p98, %p99
    %p101 = scmp.ne.s32.totalorder %s89, %s90
    %p102 = scmp.eq.s32.totalorder %s17, 1
    %p103 = por %p101, %p102
    %p105 = scmp.ne.s32.totalorder %s90, %s104
    %p106 = scmp.eq.s32.totalorder %s17, 0
    %p107 = por %p105, %p106
    %s109 = sadd.s32 %s108, 1
    %p112 = scmp.eq.s32.totalorder %s11, 1
    %p113 = scmp.ne.s32.totalorder %s108, %s110
    %p114 = scmp.eq.s32.totalorder %s11, 0
    %p115 = por %p113, %p114
    %p116 = scmp.ne.s32.totalorder %s108, %s110
    %p117 = scmp.eq.s32.totalorder %s16, 1
    %p118 = por %p116, %p117
    %p119 = scmp.ne.s32.totalorder %s110, %s111
    %p120 = scmp.eq.s32.totalorder %s16, 0
    %p121 = por %p119, %p120
    %p122 = scmp.ne.s32.totalorder %s110, %s111
    %p123 = scmp.eq.s32.totalorder %s17, 1
    %p124 = por %p122, %p123
    %p126 = scmp.ne.s32.totalorder %s111, %s125
    %p127 = scmp.eq.s32.totalorder %s17, 0
    %p128 = por %p126, %p127
    %s129 = ssub.s32 %s11, %s18
    %p130 = scmp.eq.s32.totalorder %s129, 0
    %s132 = sadd.s32 %s131, 1
    %s133 = scalar_select %p130, %s131, %s132
    %p136 = pneg %p130
    %p137 = scmp.eq.s32.totalorder %s11, 1
    %p138 = por %p136, %p137
    %p139 = scmp.ne.s32.totalorder %s131, %s134
    %p140 = scmp.eq.s32.totalorder %s11, 0
    %p141 = por %p139, %p140
    %p142 = scmp.ne.s32.totalorder %s131, %s134
    %p143 = scmp.eq.s32.totalorder %s16, 1
    %p144 = por %p142, %p143
    %p145 = scmp.ne.s32.totalorder %s134, %s135
    %p146 = scmp.eq.s32.totalorder %s16, 0
    %p147 = por %p145, %p146
    %p148 = scmp.ne.s32.totalorder %s134, %s135
    %p149 = scmp.eq.s32.totalorder %s17, 1
    %p150 = por %p148, %p149
    %p152 = scmp.ne.s32.totalorder %s135, %s151
    %p153 = scmp.eq.s32.totalorder %s17, 0
    %p154 = por %p152, %p153
    %p155 = scmp.le.s32.totalorder 1, %s11
    %p156 = scmp.lt.s32.totalorder %s11, 3
    %p157 = pnand %p155, %p156
    %p158 = pneg %p157
    // Predicated region
    $region9: #{fcb_forward.3} parent=5 // pred_check
      _
    $region10: #{fcb_forward.3} parent=5 // pred_check_branch
      %160 = sbr.rel (%p157) target = $region12
    $region11: #{fcb_forward.3} parent=5 // pred_region
      %s161 = ssub.s32 %s11, 1
      // Predicated region
      $region13: #{fcb_forward.3} parent=11 // pred_check
        %p162 = pneg %p58
      $region14: #{fcb_forward.3} parent=11 // pred_check_branch
        %164 = sbr.rel (%p162) target = $region16
      $region15: #{fcb_forward.3} parent=11 // pred_region
        _
      $region16: #{fcb_forward.3} parent=11 // pred_fallthru
        _
      // Predicated region
      $region17: #{fcb_forward.3} parent=11 // pred_check
        %p165 = pneg %p79
      $region18: #{fcb_forward.3} parent=11 // pred_check_branch
        %167 = sbr.rel (%p165) target = $region20
      $region19: #{fcb_forward.3} parent=11 // pred_region
        _
      $region20: #{fcb_forward.3} parent=11 // pred_fallthru
        _
      // Predicated region
      $region21: #{fcb_forward.3} parent=11 // pred_check
        %p168 = pneg %p100
      $region22: #{fcb_forward.3} parent=11 // pred_check_branch
        %170 = sbr.rel (%p168) target = $region24
      $region23: #{fcb_forward.3} parent=11 // pred_region
        _
      $region24: #{fcb_forward.3} parent=11 // pred_fallthru
        _
      // Predicated region
      $region25: #{fcb_forward.3} parent=11 // pred_check
        %p171 = pneg %p121
      $region26: #{fcb_forward.3} parent=11 // pred_check_branch
        %173 = sbr.rel (%p171) target = $region28
      $region27: #{fcb_forward.3} parent=11 // pred_region
        _
      $region28: #{fcb_forward.3} parent=11 // pred_fallthru
        _
    $region12: #{fcb_forward.3} parent=5 // pred_fallthru
      _
    %p174 = scmp.lt.s32.totalorder %s11, 2
    // Predicated region
    $region29: #{fcb_forward.3} parent=5 // pred_check
      %p175 = pneg %p174
    $region30: #{fcb_forward.3} parent=5 // pred_check_branch
      %177 = sbr.rel (%p175) target = $region32
    $region31: #{fcb_forward.3} parent=5 // pred_region
      // Predicated region
      $region33: #{fcb_forward.3} parent=31 // pred_check
        %p178 = pneg %p31
      $region34: #{fcb_forward.3} parent=31 // pred_check_branch
        %180 = sbr.rel (%p178) target = $region36
      $region35: #{fcb_forward.3} parent=31 // pred_region
        %p181 = scmp.lt.s32.totalorder %s11, 1
        %s182 = scalar_select %p181, %s11, 1
        %s183 = smul.addr %s182, 2
        %s184 = smul.addr %s183, 8
        %s185 = scalar_lea.vmem %s0, %s184
      $region36: #{fcb_forward.3} parent=31 // pred_fallthru
        _
    $region32: #{fcb_forward.3} parent=5 // pred_fallthru
      _
    %p186 = scmp.le.s32.totalorder 1, %s11
    %p187 = scmp.lt.s32.totalorder %s11, 3
    %p188 = pnand %p186, %p187
    %p189 = pneg %p188
    // Predicated region
    $region37: #{fcb_forward.3} parent=5 // pred_check
      _
    $region38: #{fcb_forward.3} parent=5 // pred_check_branch
      %191 = sbr.rel (%p188) target = $region40
    $region39: #{fcb_forward.3} parent=5 // pred_region
      %s192 = ssub.s32 %s11, 1
      %p193 = scmp.lt.s32.totalorder %s16, 1
      %s194 = scalar_select %p193, %s16, 1
      %s195 = smul.addr %s194, 2
      %s196 = smul.addr %s195, 8
      %s197 = scalar_lea.vmem %s0, %s196
      %p198 = pneg %p37
      %p199 = pneg %p34
      %p200 = pneg %p58
      %p201 = pneg %p55
      %p202 = pneg %p79
      %p203 = pneg %p76
      %p204 = pneg %p100
      %p205 = pneg %p97
      %p206 = pneg %p121
      %p207 = pneg %p118
      %p208 = pneg %p147
      %p209 = pneg %p144
      %p210 = scmp.lt.s32.totalorder %s16, 1
      %s211 = scalar_select %p210, %s16, 1
      %s212 = smul.addr %s211, 2
      %s213 = smul.addr %s212, 8
      %s214 = scalar_lea.vmem %s5, %s213
      %p215 = scmp.lt.s32.totalorder %s16, 1
      %s216 = scalar_select %p215, %s16, 1
      %s217 = smul.addr %s216, 2
      %s218 = smul.addr %s217, 8
      %s219 = scalar_lea.vmem %s0, %s218
      %p220 = scmp.lt.s32.totalorder %s16, 1
      %s221 = scalar_select %p220, %s16, 1
      %s222 = smul.addr %s221, 2
      %s223 = smul.addr %s222, 8
      %s224 = scalar_lea.vmem %s5, %s223
      %v225 = vld [vmem:[%s219] sm:$0xff]
      %v226 = vld [vmem:[%s219 + $0x8] sm:$0xff]
      %v227 = vld [vmem:[%s1] sm:$0xff]
      %229 = vset.pattern.permute.xlu0 0
      %230 = vperm.xlu0 %229, %v227
      %v231 = vpop.permute.xlu0 %230
      %v233 = vmul.f32 %v225, %v231
      %v234 = vmul.f32 %v226, %v231
      %v235 = vld [vmem:[%s2] sm:$0xff]
      %237 = vset.pattern.permute.xlu0 0
      %238 = vperm.xlu0 %237, %v235
      %v239 = vpop.permute.xlu0 %238
      %v241 = vadd.f32 %v233, %v239
      %v242 = vadd.f32 %v234, %v239
      %v243 = vmul.f32 %v241, 0.5
      %v244 = vmul.f32 %v242, 0.5
      %v245 = vmul.f32 %v241, 0.70710677
      %v246 = vmul.f32 %v242, 0.70710677
      %v247 = verf.f32.pop %v245
      %v248 = verf.f32.pop %v246
      %v249 = vadd.f32 %v247, 1.0
      %v250 = vadd.f32 %v248, 1.0
      %v251 = vmul.f32 %v243, %v249
      %v252 = vmul.f32 %v244, %v250
      %v253 = vld [vmem:[%s3] sm:$0xff]
      %v254 = vld [vmem:[%s4] sm:$0xff]
      %256 = vset.pattern.permute.xlu0 0
      %257 = vperm.xlu0 %256, %v254
      %v258 = vpop.permute.xlu0 %257
      %vm260 = vcmask 64512
      %v262 = vsel %vm260, %v253, 0
      %264 = vmatprep.subr.mxu0 0.0
      %265 = vmatpush1.msra.mxu0 0.0
      %266 = vmatprep.subr.mxu0 0.0
      %267 = vmatpush1.msra.mxu0 0.0
      %268 = vmatprep.subr.mxu0 0.0
      %269 = vmatpush1.msra.mxu0 0.0
      %270 = vmatprep.subr.mxu0 0.0
      %271 = vmatpush1.msra.mxu0 0.0
      %272 = vmatprep.subr.mxu0 0.0
      %273 = vmatpush1.msra.mxu0 0.0
      %274 = vmatprep.subr.mxu0 0.0
      %275 = vmatpush1.msra.mxu0 0.0
      %276 = vmatprep.subr.mxu0 0.0
      %277 = vmatpush1.msra.mxu0 0.0
      %278 = vmatprep.subr.mxu0 0.0
      %279 = vmatpush1.msra.mxu0 0.0
      %280 = vmatprep.subr.mxu0 0.0
      %281 = vmatpush1.msra.mxu0 0.0
      %282 = vmatprep.subr.mxu0 0.0
      %283 = vmatpush1.msra.mxu0 0.0
      %284 = vmatprep.subr.mxu0 0.0
      %285 = vmatpush1.msra.mxu0 0.0
      %286 = vmatprep.subr.mxu0 0.0
      %287 = vmatpush1.msra.mxu0 0.0
      %288 = vmatprep.subr.mxu0 0.0
      %289 = vmatpush1.msra.mxu0 0.0
      %290 = vmatprep.subr.mxu0 0.0
      %291 = vmatpush1.msra.mxu0 0.0
      %292 = vmatprep.subr.mxu0 0.0
      %293 = vmatpush1.msra.mxu0 0.0
      %294 = vmatprep.subr.mxu0 %v252
      %295 = vmatpush1.msra.mxu0 %v251
      %296 = vmatprep.subr.mxu0 0.0
      %297 = vmatpush2.msra.mxu0 0.0
      %298 = vmatprep.subr.mxu0 0.0
      %299 = vmatpush2.msra.mxu0 0.0
      %300 = vmatprep.subr.mxu0 0.0
      %301 = vmatpush2.msra.mxu0 0.0
      %302 = vmatprep.subr.mxu0 0.0
      %303 = vmatpush2.msra.mxu0 0.0
      %304 = vmatprep.subr.mxu0 0.0
      %305 = vmatpush2.msra.mxu0 0.0
      %306 = vmatprep.subr.mxu0 0.0
      %307 = vmatpush2.msra.mxu0 0.0
      %308 = vmatprep.subr.mxu0 0.0
      %309 = vmatpush2.msra.mxu0 0.0
      %310 = vmatprep.subr.mxu0 0.0
      %311 = vmatpush2.msra.mxu0 0.0
      %312 = vmatprep.subr.mxu0 0.0
      %313 = vmatpush2.msra.mxu0 0.0
      %314 = vmatprep.subr.mxu0 0.0
      %315 = vmatpush2.msra.mxu0 0.0
      %316 = vmatprep.subr.mxu0 0.0
      %317 = vmatpush2.msra.mxu0 0.0
      %318 = vmatprep.subr.mxu0 0.0
      %319 = vmatpush2.msra.mxu0 0.0
      %320 = vmatprep.subr.mxu0 0.0
      %321 = vmatpush2.msra.mxu0 0.0
      %322 = vmatprep.subr.mxu0 0.0
      %323 = vmatpush2.msra.mxu0 0.0
      %324 = vmatprep.subr.mxu0 0.0
      %325 = vmatpush2.msra.mxu0 0.0
      %326 = vmatprep.subr.mxu0 0.0
      %327 = vmatpush2.msra.mxu0 0.0
      %328 = vmatprep.mubr.f32.mxu0 0.0
      %329 = vmatmul.mubr.f32.gmra.mxu0 %v262
      %v330 = vpop.f32.mrf.mxu0
      %v331 = vadd.f32 %v258, %v330
      %v332 = vpop.f32.mrf.mxu0
      %v333 = vadd.f32 %v258, %v332
      %334 = vdwg.mxu0
      %v335 = vxor.u32 %v331, 2147483648
      %v336 = vxor.u32 %v333, 2147483648
      %v337 = vmul.f32 %v335, 1.442695
      %v338 = vpow.pop %v337
      %v339 = vmul.f32 %v336, 1.442695
      %v340 = vpow.pop %v339
      %v341 = vadd.f32 %v338, 1.0
      %v342 = vadd.f32 %v340, 1.0
      %v343 = vrcp.pop %v341
      %v344 = vmul.f32 1.0, %v343
      %v345 = vrcp.pop %v342
      %v346 = vmul.f32 1.0, %v345
      %v347 = vmul.f32 %v344, %v251
      %v348 = vmul.f32 %v346, %v252
      %349 = vst [vmem:[%s224] sm:$0xff] %v347
      %350 = vst [vmem:[%s224 + $0x8] sm:$0xff] %v348
      %p351 = scmp.lt.s32.totalorder %s16, 1
      %s352 = scalar_select %p351, %s16, 1
      %s353 = smul.addr %s352, 2
      %s354 = smul.addr %s353, 8
      %s355 = scalar_lea.vmem %s5, %s354
      // Predicated region
      $region41: #{fcb_forward.3} parent=39 // pred_check
        %p356 = pneg %p144
      $region42: #{fcb_forward.3} parent=39 // pred_check_branch
        %358 = sbr.rel (%p356) target = $region44
      $region43: #{fcb_forward.3} parent=39 // pred_region
        _
      $region44: #{fcb_forward.3} parent=39 // pred_fallthru
        _
    $region40: #{fcb_forward.3} parent=5 // pred_fallthru
      _
    %p359 = scmp.le.s32.totalorder 2, %s11
    // Predicated region
    $region45: #{fcb_forward.3} parent=5 // pred_check
      %p360 = pneg %p359
    $region46: #{fcb_forward.3} parent=5 // pred_check_branch
      %362 = sbr.rel (%p360) target = $region48
    $region47: #{fcb_forward.3} parent=5 // pred_region
      %s363 = ssub.s32 %s11, 2
      // Predicated region
      $region49: #{fcb_forward.3} parent=47 // pred_check
        %p364 = pneg %p150
      $region50: #{fcb_forward.3} parent=47 // pred_check_branch
        %366 = sbr.rel (%p364) target = $region52
      $region51: #{fcb_forward.3} parent=47 // pred_region
        %p367 = scmp.lt.s32.totalorder %s17, 1
        %s368 = scalar_select %p367, %s17, 1
        %s369 = smul.addr %s368, 2
        %s370 = smul.addr %s369, 8
        %s371 = scalar_lea.vmem %s5, %s370
      $region52: #{fcb_forward.3} parent=47 // pred_fallthru
        _
    $region48: #{fcb_forward.3} parent=5 // pred_fallthru
      _
  $region6: #{fcb_forward.3} parent=0 // loop_footer
    %s15 = sadd.s32 1, %s11
  $region7: #{fcb_forward.3} parent=0 // loop_footer_branch
    %10 = sbr.rel target = $region3
  $region8: #{fcb_forward.3} parent=0 // loop_exit
    _

// kernel: fcb_forward.2
$region0: #{fcb_forward.2}
  #allocation0 [shape = 'u32[]', space=smem, size = 0x4, offset = 0x4, fixed_abs, tag = 'smem constant byte address 0x4 - core index']
  #allocation1 [shape = 'u32[144,128]{1,0:T(1,128)}', space=vmem, size = 0x12000, scoped, tag = 'internal scratch']
  %s0 = inlined_call_operand.vmem [shape: f32[2,4,256], index: 0, kind: input, shape index: {}]
  %s1 = inlined_call_operand.vmem [shape: f32[9,256], index: 1, kind: input, shape index: {}]
  %s2 = inlined_call_operand.vmem [shape: f32[36,8,1], index: 2, kind: input, shape index: {}]
  %s3 = inlined_call_operand.vmem [shape: f32[8,1], index: 3, kind: input, shape index: {}]
  %s4 = inlined_call_operand.vmem [shape: f32[2,8,256], index: 4, kind: output, shape index: {0}]
  %s5 = inlined_call_operand.vmem [shape: f32[2,2,8,1], index: 5, kind: output, shape index: {1}]
  %6 = xla_tuple %s4, %s5
  %s7 = sld [smem:[#allocation0]]
  $region57: #{fcb_forward.2} parent=0
    _
  %s9 = ssub.s32 1, %s7
  %s10 = scalar_select 0, %s9, %s7
  loop: start=0, step=1, limit=4
  $region2: #{fcb_forward.2} parent=0 // loop_pre_header
    _
  $region3: #{fcb_forward.2} parent=0 // loop_header
    %s12 = sphi 0, %s16
    %p13 = scmp.ge.s32.totalorder %s12, 4
    %s22 = sphi 0, %s24
    %s25 = sphi 0, %s22
    %s26 = sphi 0, %s25
    %s42 = sphi 0, %s26
    %s46 = sphi 0, %s46
    %s48 = sphi 0, %s46
    %s49 = sphi 0, %s48
    %s63 = sphi 0, %s49
    %s67 = sphi 0, %s67
    %s69 = sphi 0, %s67
    %s70 = sphi 0, %s69
    %s84 = sphi 0, %s70
    %s88 = sphi 0, %s88
    %s90 = sphi 0, %s88
    %s91 = sphi 0, %s90
    %s105 = sphi 0, %s91
    %s111 = sphi 0, %s113
    %s114 = sphi 0, %s111
    %s115 = sphi 0, %s114
    %s131 = sphi 0, %s115
    %s137 = sphi 0, %s139
    %s140 = sphi 0, %s137
    %s141 = sphi 0, %s140
    %s157 = sphi 0, %s141
  $region4: #{fcb_forward.2} parent=0 // loop_header_branch
    %15 = sbr.rel (%p13) target = $region8
  $region5: #{fcb_forward.2} parent=0 // loop_body
    %s17 = ssub.s32 %s12, 1
    %s18 = ssub.s32 %s12, 2
    %s19 = sadd.s32 %s12, 1
    %s20 = ssub.s32 %s12, %s19
    %p21 = scmp.eq.s32.totalorder %s20, 0
    %s23 = sadd.s32 %s22, 1
    %s24 = scalar_select %p21, %s22, %s23
    %p27 = pneg %p21
    %p28 = scmp.eq.s32.totalorder %s12, 1
    %p29 = por %p27, %p28
    %p30 = scmp.ne.s32.totalorder %s22, %s25
    %p31 = scmp.eq.s32.totalorder %s12, 0
    %p32 = por %p30, %p31
    %p33 = scmp.ne.s32.totalorder %s22, %s25
    %p34 = scmp.eq.s32.totalorder %s17, 1
    %p35 = por %p33, %p34
    %p36 = scmp.ne.s32.totalorder %s25, %s26
    %p37 = scmp.eq.s32.totalorder %s17, 0
    %p38 = por %p36, %p37
    %p39 = scmp.ne.s32.totalorder %s25, %s26
    %p40 = scmp.eq.s32.totalorder %s18, 1
    %p41 = por %p39, %p40
    %p43 = scmp.ne.s32.totalorder %s26, %s42
    %p44 = scmp.eq.s32.totalorder %s18, 0
    %p45 = por %p43, %p44
    %s47 = sadd.s32 %s46, 1
    %p50 = scmp.eq.s32.totalorder %s12, 1
    %p51 = scmp.ne.s32.totalorder %s46, %s48
    %p52 = scmp.eq.s32.totalorder %s12, 0
    %p53 = por %p51, %p52
    %p54 = scmp.ne.s32.totalorder %s46, %s48
    %p55 = scmp.eq.s32.totalorder %s17, 1
    %p56 = por %p54, %p55
    %p57 = scmp.ne.s32.totalorder %s48, %s49
    %p58 = scmp.eq.s32.totalorder %s17, 0
    %p59 = por %p57, %p58
    %p60 = scmp.ne.s32.totalorder %s48, %s49
    %p61 = scmp.eq.s32.totalorder %s18, 1
    %p62 = por %p60, %p61
    %p64 = scmp.ne.s32.totalorder %s49, %s63
    %p65 = scmp.eq.s32.totalorder %s18, 0
    %p66 = por %p64, %p65
    %s68 = sadd.s32 %s67, 1
    %p71 = scmp.eq.s32.totalorder %s12, 1
    %p72 = scmp.ne.s32.totalorder %s67, %s69
    %p73 = scmp.eq.s32.totalorder %s12, 0
    %p74 = por %p72, %p73
    %p75 = scmp.ne.s32.totalorder %s67, %s69
    %p76 = scmp.eq.s32.totalorder %s17, 1
    %p77 = por %p75, %p76
    %p78 = scmp.ne.s32.totalorder %s69, %s70
    %p79 = scmp.eq.s32.totalorder %s17, 0
    %p80 = por %p78, %p79
    %p81 = scmp.ne.s32.totalorder %s69, %s70
    %p82 = scmp.eq.s32.totalorder %s18, 1
    %p83 = por %p81, %p82
    %p85 = scmp.ne.s32.totalorder %s70, %s84
    %p86 = scmp.eq.s32.totalorder %s18, 0
    %p87 = por %p85, %p86
    %s89 = sadd.s32 %s88, 1
    %p92 = scmp.eq.s32.totalorder %s12, 1
    %p93 = scmp.ne.s32.totalorder %s88, %s90
    %p94 = scmp.eq.s32.totalorder %s12, 0
    %p95 = por %p93, %p94
    %p96 = scmp.ne.s32.totalorder %s88, %s90
    %p97 = scmp.eq.s32.totalorder %s17, 1
    %p98 = por %p96, %p97
    %p99 = scmp.ne.s32.totalorder %s90, %s91
    %p100 = scmp.eq.s32.totalorder %s17, 0
    %p101 = por %p99, %p100
    %p102 = scmp.ne.s32.totalorder %s90, %s91
    %p103 = scmp.eq.s32.totalorder %s18, 1
    %p104 = por %p102, %p103
    %p106 = scmp.ne.s32.totalorder %s91, %s105
    %p107 = scmp.eq.s32.totalorder %s18, 0
    %p108 = por %p106, %p107
    %s109 = ssub.s32 %s12, %s19
    %p110 = scmp.eq.s32.totalorder %s109, 0
    %s112 = sadd.s32 %s111, 1
    %s113 = scalar_select %p110, %s111, %s112
    %p116 = pneg %p110
    %p117 = scmp.eq.s32.totalorder %s12, 1
    %p118 = por %p116, %p117
    %p119 = scmp.ne.s32.totalorder %s111, %s114
    %p120 = scmp.eq.s32.totalorder %s12, 0
    %p121 = por %p119, %p120
    %p122 = scmp.ne.s32.totalorder %s111, %s114
    %p123 = scmp.eq.s32.totalorder %s17, 1
    %p124 = por %p122, %p123
    %p125 = scmp.ne.s32.totalorder %s114, %s115
    %p126 = scmp.eq.s32.totalorder %s17, 0
    %p127 = por %p125, %p126
    %p128 = scmp.ne.s32.totalorder %s114, %s115
    %p129 = scmp.eq.s32.totalorder %s18, 1
    %p130 = por %p128, %p129
    %p132 = scmp.ne.s32.totalorder %s115, %s131
    %p133 = scmp.eq.s32.totalorder %s18, 0
    %p134 = por %p132, %p133
    %s135 = ssub.s32 %s12, %s19
    %p136 = scmp.eq.s32.totalorder %s135, 0
    %s138 = sadd.s32 %s137, 1
    %s139 = scalar_select %p136, %s137, %s138
    %p142 = pneg %p136
    %p143 = scmp.eq.s32.totalorder %s12, 1
    %p144 = por %p142, %p143
    %p145 = scmp.ne.s32.totalorder %s137, %s140
    %p146 = scmp.eq.s32.totalorder %s12, 0
    %p147 = por %p145, %p146
    %p148 = scmp.ne.s32.totalorder %s137, %s140
    %p149 = scmp.eq.s32.totalorder %s17, 1
    %p150 = por %p148, %p149
    %p151 = scmp.ne.s32.totalorder %s140, %s141
    %p152 = scmp.eq.s32.totalorder %s17, 0
    %p153 = por %p151, %p152
    %p154 = scmp.ne.s32.totalorder %s140, %s141
    %p155 = scmp.eq.s32.totalorder %s18, 1
    %p156 = por %p154, %p155
    %p158 = scmp.ne.s32.totalorder %s141, %s157
    %p159 = scmp.eq.s32.totalorder %s18, 0
    %p160 = por %p158, %p159
    %p161 = scmp.le.s32.totalorder 1, %s12
    %p162 = scmp.lt.s32.totalorder %s12, 3
    %p163 = pnand %p161, %p162
    %p164 = pneg %p163
    // Predicated region
    $region9: #{fcb_forward.2} parent=5 // pred_check
      _
    $region10: #{fcb_forward.2} parent=5 // pred_check_branch
      %166 = sbr.rel (%p163) target = $region12
    $region11: #{fcb_forward.2} parent=5 // pred_region
      %s167 = ssub.s32 %s12, 1
      // Predicated region
      $region13: #{fcb_forward.2} parent=11 // pred_check
        %p168 = pneg %p59
      $region14: #{fcb_forward.2} parent=11 // pred_check_branch
        %170 = sbr.rel (%p168) target = $region16
      $region15: #{fcb_forward.2} parent=11 // pred_region
        _
      $region16: #{fcb_forward.2} parent=11 // pred_fallthru
        _
      // Predicated region
      $region17: #{fcb_forward.2} parent=11 // pred_check
        %p171 = pneg %p80
      $region18: #{fcb_forward.2} parent=11 // pred_check_branch
        %173 = sbr.rel (%p171) target = $region20
      $region19: #{fcb_forward.2} parent=11 // pred_region
        _
      $region20: #{fcb_forward.2} parent=11 // pred_fallthru
        _
      // Predicated region
      $region21: #{fcb_forward.2} parent=11 // pred_check
        %p174 = pneg %p101
      $region22: #{fcb_forward.2} parent=11 // pred_check_branch
        %176 = sbr.rel (%p174) target = $region24
      $region23: #{fcb_forward.2} parent=11 // pred_region
        _
      $region24: #{fcb_forward.2} parent=11 // pred_fallthru
        _
    $region12: #{fcb_forward.2} parent=5 // pred_fallthru
      _
    %p177 = scmp.lt.s32.totalorder %s12, 2
    // Predicated region
    $region25: #{fcb_forward.2} parent=5 // pred_check
      %p178 = pneg %p177
    $region26: #{fcb_forward.2} parent=5 // pred_check_branch
      %180 = sbr.rel (%p178) target = $region28
    $region27: #{fcb_forward.2} parent=5 // pred_region
      // Predicated region
      $region29: #{fcb_forward.2} parent=27 // pred_check
        %p181 = pneg %p32
      $region30: #{fcb_forward.2} parent=27 // pred_check_branch
        %183 = sbr.rel (%p181) target = $region32
      $region31: #{fcb_forward.2} parent=27 // pred_region
        %p184 = scmp.lt.s32.totalorder %s12, 1
        %s185 = scalar_select %p184, %s12, 1
        %s186 = smul.addr %s185, 2
        %s187 = smul.addr %s186, 4
        %s188 = scalar_lea.vmem %s0, %s187
      $region32: #{fcb_forward.2} parent=27 // pred_fallthru
        _
    $region28: #{fcb_forward.2} parent=5 // pred_fallthru
      _
    %p189 = scmp.le.s32.totalorder 1, %s12
    %p190 = scmp.lt.s32.totalorder %s12, 3
    %p191 = pnand %p189, %p190
    %p192 = pneg %p191
    // Predicated region
    $region33: #{fcb_forward.2} parent=5 // pred_check
      _
    $region34: #{fcb_forward.2} parent=5 // pred_check_branch
      %194 = sbr.rel (%p191) target = $region36
    $region35: #{fcb_forward.2} parent=5 // pred_region
      %s195 = ssub.s32 %s12, 1
      %p196 = scmp.lt.s32.totalorder %s17, 1
      %s197 = scalar_select %p196, %s17, 1
      %s198 = smul.addr %s197, 2
      %s199 = smul.addr %s198, 4
      %s200 = scalar_lea.vmem %s0, %s199
      %p201 = pneg %p38
      %p202 = pneg %p35
      %p203 = pneg %p59
      %p204 = pneg %p56
      %p205 = pneg %p80
      %p206 = pneg %p77
      %p207 = pneg %p101
      %p208 = pneg %p98
      %p209 = pneg %p127
      %p210 = pneg %p124
      %p211 = scmp.lt.s32.totalorder %s17, 1
      %s212 = scalar_select %p211, %s17, 1
      %s213 = smul.addr %s212, 2
      %s214 = smul.addr %s213, 8
      %s215 = scalar_lea.vmem %s4, %s214
      %p216 = pneg %p153
      %p217 = pneg %p150
      %p218 = scmp.lt.s32.totalorder %s17, 1
      %s219 = scalar_select %p218, %s17, 1
      %s220 = smul.addr %s219, 2
      %s221 = smul.addr %s220, 8
      %s222 = scalar_lea.vmem %s5, %s221
      %p223 = scmp.lt.s32.totalorder %s17, 1
      %s224 = scalar_select %p223, %s17, 1
      %s225 = smul.addr %s224, 2
      %s226 = smul.addr %s225, 4
      %s227 = scalar_lea.vmem %s0, %s226
      %p228 = scmp.lt.s32.totalorder %s17, 1
      %s229 = scalar_select %p228, %s17, 1
      %s230 = smul.addr %s229, 2
      %s231 = smul.addr %s230, 8
      %s232 = scalar_lea.vmem %s4, %s231
      %p233 = scmp.lt.s32.totalorder %s17, 1
      %s234 = scalar_select %p233, %s17, 1
      %s235 = smul.addr %s234, 2
      %s236 = smul.addr %s235, 8
      %s237 = scalar_lea.vmem %s5, %s236
      %v238 = vld [vmem:[%s227] sm:$0xff]
      %v240 = vcombine.high %v238, %v238
      %242 = vrot.lane.b32.xlu0 %v238, 17
      %v243 = vpop.permute.xlu0 %242
      %244 = vrot.lane.b32.xlu0 %v240, 17
      %v245 = vpop.permute.xlu0 %244
      %v246 = vlaneseq
      %v247 = vand.u32 %v246, 127
      %vm248 = vcmp.lt.s32.totalorder %v247, 17
      %v249 = vsel %vm248, %v243, %v245
      %v250 = vsel %vm248, %v245, %v243
      %v251 = vld [vmem:[%s1] ss:$8 sm:$0x3]
      %v253 = vlaneseq
      %v254 = vshrl.u32 %v253, 7
      %v255 = vsub.s32 0, %v254
      %v256 = vrot.slane %v251, %v255
      %v257 = vlaneseq
      %v258 = vshrl.u32 %v257, 7
      %v259 = vsub.s32 1, %v258
      %v260 = vrot.slane %v251, %v259
      %v263 = vmul.f32 %v250, %v256
      %v264 = vmul.f32 %v249, %v260
      %v265 = vld [vmem:[%s2] sm:$0xff]
      %267 = vset.pattern.permute.xlu0 0
      %268 = vperm.xlu0 %267, %v265
      %v269 = vpop.permute.xlu0 %268
      %v271 = vlaneseq
      %v272 = vshrl.u32 %v271, 7
      %v273 = vsub.s32 0, %v272
      %v274 = vrot.slane %v263, %v273
      %v275 = vlaneseq
      %v276 = vshrl.u32 %v275, 7
      %v277 = vsub.s32 0, %v276
      %v278 = vrot.slane %v264, %v277
      %v279 = vmul.f32 %v269, %v274
      %v280 = vmul.f32 %v269, %v278
      %v281 = vadd.f32 %v279, 0.0
      %v282 = vadd.f32 %v280, 0.0
      %s283 = scalar_lea.vmem %s2, 8
      %v284 = vld [vmem:[%s283] sm:$0xff]
      %286 = vset.pattern.permute.xlu0 0
      %287 = vperm.xlu0 %286, %v284
      %v288 = vpop.permute.xlu0 %287
      %v290 = vlaneseq
      %v291 = vshrl.u32 %v290, 7
      %v292 = vsub.s32 1, %v291
      %v293 = vrot.slane %v263, %v292
      %v294 = vlaneseq
      %v295 = vshrl.u32 %v294, 7
      %v296 = vsub.s32 1, %v295
      %v297 = vrot.slane %v264, %v296
      %v298 = vmul.f32 %v288, %v293
      %v299 = vmul.f32 %v288, %v297
      %v300 = vadd.f32 %v281, %v298
      %v301 = vadd.f32 %v282, %v299
      %s302 = scalar_lea.vmem %s2, 16
      %v303 = vld [vmem:[%s302] sm:$0xff]
      %305 = vset.pattern.permute.xlu0 0
      %306 = vperm.xlu0 %305, %v303
      %v307 = vpop.permute.xlu0 %306
      %v309 = vlaneseq
      %v310 = vshrl.u32 %v309, 7
      %v311 = vsub.s32 2, %v310
      %v312 = vrot.slane %v263, %v311
      %v313 = vlaneseq
      %v314 = vshrl.u32 %v313, 7
      %v315 = vsub.s32 2, %v314
      %v316 = vrot.slane %v264, %v315
      %v317 = vmul.f32 %v307, %v312
      %v318 = vmul.f32 %v307, %v316
      %v319 = vadd.f32 %v300, %v317
      %v320 = vadd.f32 %v301, %v318
      %s321 = scalar_lea.vmem %s2, 24
      %v322 = vld [vmem:[%s321] sm:$0xff]
      %324 = vset.pattern.permute.xlu0 0
      %325 = vperm.xlu0 %324, %v322
      %v326 = vpop.permute.xlu0 %325
      %v328 = vlaneseq
      %v329 = vshrl.u32 %v328, 7
      %v330 = vsub.s32 3, %v329
      %v331 = vrot.slane %v263, %v330
      %v332 = vlaneseq
      %v333 = vshrl.u32 %v332, 7
      %v334 = vsub.s32 3, %v333
      %v335 = vrot.slane %v264, %v334
      %v336 = vmul.f32 %v326, %v331
      %v337 = vmul.f32 %v326, %v335
      %v338 = vadd.f32 %v319, %v336
      %v339 = vadd.f32 %v320, %v337
      %340 = vrot.lane.b32.xlu0 %v238, 16
      %v341 = vpop.permute.xlu0 %340
      %342 = vrot.lane.b32.xlu0 %v240, 16
      %v343 = vpop.permute.xlu0 %342
      %vm344 = vcmp.lt.s32.totalorder %v247, 16
      %v345 = vsel %vm344, %v341, %v343
      %v346 = vsel %vm344, %v343, %v341
      %s347 = scalar_lea.vmem %s1, 1
      %v348 = vld [vmem:[%s347] ss:$8 sm:$0x3]
      %v350 = vlaneseq
      %v351 = vshrl.u32 %v350, 7
      %v352 = vsub.s32 0, %v351
      %v353 = vrot.slane %v348, %v352
      %v354 = vlaneseq
      %v355 = vshrl.u32 %v354, 7
      %v356 = vsub.s32 1, %v355
      %v357 = vrot.slane %v348, %v356
      %v360 = vmul.f32 %v346, %v353
      %v361 = vmul.f32 %v345, %v357
      %s362 = scalar_lea.vmem %s2, 32
      %v363 = vld [vmem:[%s362] sm:$0xff]
      %365 = vset.pattern.permute.xlu0 0
      %366 = vperm.xlu0 %365, %v363
      %v367 = vpop.permute.xlu0 %366
      %v369 = vlaneseq
      %v370 = vshrl.u32 %v369, 7
      %v371 = vsub.s32 0, %v370
      %v372 = vrot.slane %v360, %v371
      %v373 = vlaneseq
      %v374 = vshrl.u32 %v373, 7
      %v375 = vsub.s32 0, %v374
      %v376 = vrot.slane %v361, %v375
      %v377 = vmul.f32 %v367, %v372
      %v378 = vmul.f32 %v367, %v376
      %v379 = vadd.f32 %v338, %v377
      %v380 = vadd.f32 %v339, %v378
      %s381 = scalar_lea.vmem %s2, 40
      %v382 = vld [vmem:[%s381] sm:$0xff]
      %384 = vset.pattern.permute.xlu0 0
      %385 = vperm.xlu0 %384, %v382
      %v386 = vpop.permute.xlu0 %385
      %v388 = vlaneseq
      %v389 = vshrl.u32 %v388, 7
      %v390 = vsub.s32 1, %v389
      %v391 = vrot.slane %v360, %v390
      %v392 = vlaneseq
      %v393 = vshrl.u32 %v392, 7
      %v394 = vsub.s32 1, %v393
      %v395 = vrot.slane %v361, %v394
      %v396 = vmul.f32 %v386, %v391
      %v397 = vmul.f32 %v386, %v395
      %v398 = vadd.f32 %v379, %v396
      %v399 = vadd.f32 %v380, %v397
      %s400 = scalar_lea.vmem %s2, 48
      %v401 = vld [vmem:[%s400] sm:$0xff]
      %403 = vset.pattern.permute.xlu0 0
      %404 = vperm.xlu0 %403, %v401
      %v405 = vpop.permute.xlu0 %404
      %v407 = vlaneseq
      %v408 = vshrl.u32 %v407, 7
      %v409 = vsub.s32 2, %v408
      %v410 = vrot.slane %v360, %v409
      %v411 = vlaneseq
      %v412 = vshrl.u32 %v411, 7
      %v413 = vsub.s32 2, %v412
      %v414 = vrot.slane %v361, %v413
      %v415 = vmul.f32 %v405, %v410
      %v416 = vmul.f32 %v405, %v414
      %v417 = vadd.f32 %v398, %v415
      %v418 = vadd.f32 %v399, %v416
      %s419 = scalar_lea.vmem %s2, 56
      %v420 = vld [vmem:[%s419] sm:$0xff]
      %422 = vset.pattern.permute.xlu0 0
      %423 = vperm.xlu0 %422, %v420
      %v424 = vpop.permute.xlu0 %423
      %v426 = vlaneseq
      %v427 = vshrl.u32 %v426, 7
      %v428 = vsub.s32 3, %v427
      %v429 = vrot.slane %v360, %v428
      %v430 = vlaneseq
      %v431 = vshrl.u32 %v430, 7
      %v432 = vsub.s32 3, %v431
      %v433 = vrot.slane %v361, %v432
      %v434 = vmul.f32 %v424, %v429
      %v435 = vmul.f32 %v424, %v433
      %v436 = vadd.f32 %v417, %v434
      %v437 = vadd.f32 %v418, %v435
      %438 = vrot.lane.b32.xlu0 %v238, 15
      %v439 = vpop.permute.xlu0 %438
      %440 = vrot.lane.b32.xlu0 %v240, 15
      %v441 = vpop.permute.xlu0 %440
      %vm442 = vcmp.lt.s32.totalorder %v247, 15
      %v443 = vsel %vm442, %v439, %v441
      %v444 = vsel %vm442, %v441, %v439
      %s445 = scalar_lea.vmem %s1, 2
      %v446 = vld [vmem:[%s445] ss:$8 sm:$0x3]
      %v448 = vlaneseq
      %v449 = vshrl.u32 %v448, 7
      %v450 = vsub.s32 0, %v449
      %v451 = vrot.slane %v446, %v450
      %v452 = vlaneseq
      %v453 = vshrl.u32 %v452, 7
      %v454 = vsub.s32 1, %v453
      %v455 = vrot.slane %v446, %v454
      %v458 = vmul.f32 %v444, %v451
      %v459 = vmul.f32 %v443, %v455
      %s460 = scalar_lea.vmem %s2, 64
      %v461 = vld [vmem:[%s460] sm:$0xff]
      %463 = vset.pattern.permute.xlu0 0
      %464 = vperm.xlu0 %463, %v461
      %v465 = vpop.permute.xlu0 %464
      %v467 = vlaneseq
      %v468 = vshrl.u32 %v467, 7
      %v469 = vsub.s32 0, %v468
      %v470 = vrot.slane %v458, %v469
      %v471 = vlaneseq
      %v472 = vshrl.u32 %v471, 7
      %v473 = vsub.s32 0, %v472
      %v474 = vrot.slane %v459, %v473
      %v475 = vmul.f32 %v465, %v470
      %v476 = vmul.f32 %v465, %v474
      %v477 = vadd.f32 %v436, %v475
      %v478 = vadd.f32 %v437, %v476
      %s479 = scalar_lea.vmem %s2, 72
      %v480 = vld [vmem:[%s479] sm:$0xff]
      %482 = vset.pattern.permute.xlu0 0
      %483 = vperm.xlu0 %482, %v480
      %v484 = vpop.permute.xlu0 %483
      %v486 = vlaneseq
      %v487 = vshrl.u32 %v486, 7
      %v488 = vsub.s32 1, %v487
      %v489 = vrot.slane %v458, %v488
      %v490 = vlaneseq
      %v491 = vshrl.u32 %v490, 7
      %v492 = vsub.s32 1, %v491
      %v493 = vrot.slane %v459, %v492
      %v494 = vmul.f32 %v484, %v489
      %v495 = vmul.f32 %v484, %v493
      %v496 = vadd.f32 %v477, %v494
      %v497 = vadd.f32 %v478, %v495
      %s498 = scalar_lea.vmem %s2, 80
      %v499 = vld [vmem:[%s498] sm:$0xff]
      %501 = vset.pattern.permute.xlu0 0
      %502 = vperm.xlu0 %501, %v499
      %v503 = vpop.permute.xlu0 %502
      %v505 = vlaneseq
      %v506 = vshrl.u32 %v505, 7
      %v507 = vsub.s32 2, %v506
      %v508 = vrot.slane %v458, %v507
      %v509 = vlaneseq
      %v510 = vshrl.u32 %v509, 7
      %v511 = vsub.s32 2, %v510
      %v512 = vrot.slane %v459, %v511
      %v513 = vmul.f32 %v503, %v508
      %v514 = vmul.f32 %v503, %v512
      %v515 = vadd.f32 %v496, %v513
      %v516 = vadd.f32 %v497, %v514
      %s517 = scalar_lea.vmem %s2, 88
      %v518 = vld [vmem:[%s517] sm:$0xff]
      %520 = vset.pattern.permute.xlu0 0
      %521 = vperm.xlu0 %520, %v518
      %v522 = vpop.permute.xlu0 %521
      %v524 = vlaneseq
      %v525 = vshrl.u32 %v524, 7
      %v526 = vsub.s32 3, %v525
      %v527 = vrot.slane %v458, %v526
      %v528 = vlaneseq
      %v529 = vshrl.u32 %v528, 7
      %v530 = vsub.s32 3, %v529
      %v531 = vrot.slane %v459, %v530
      %v532 = vmul.f32 %v522, %v527
      %v533 = vmul.f32 %v522, %v531
      %v534 = vadd.f32 %v515, %v532
      %v535 = vadd.f32 %v516, %v533
      %536 = vrot.lane.b32.xlu0 %v238, 1
      %v537 = vpop.permute.xlu0 %536
      %538 = vrot.lane.b32.xlu0 %v240, 1
      %v539 = vpop.permute.xlu0 %538
      %vm540 = vcmp.lt.s32.totalorder %v247, 1
      %v541 = vsel %vm540, %v537, %v539
      %v542 = vsel %vm540, %v539, %v537
      %s543 = scalar_lea.vmem %s1, 3
      %v544 = vld [vmem:[%s543] ss:$8 sm:$0x3]
      %v546 = vlaneseq
      %v547 = vshrl.u32 %v546, 7
      %v548 = vsub.s32 0, %v547
      %v549 = vrot.slane %v544, %v548
      %v550 = vlaneseq
      %v551 = vshrl.u32 %v550, 7
      %v552 = vsub.s32 1, %v551
      %v553 = vrot.slane %v544, %v552
      %v556 = vmul.f32 %v542, %v549
      %v557 = vmul.f32 %v541, %v553
      %s558 = scalar_lea.vmem %s2, 96
      %v559 = vld [vmem:[%s558] sm:$0xff]
      %561 = vset.pattern.permute.xlu0 0
      %562 = vperm.xlu0 %561, %v559
      %v563 = vpop.permute.xlu0 %562
      %v565 = vlaneseq
      %v566 = vshrl.u32 %v565, 7
      %v567 = vsub.s32 0, %v566
      %v568 = vrot.slane %v556, %v567
      %v569 = vlaneseq
      %v570 = vshrl.u32 %v569, 7
      %v571 = vsub.s32 0, %v570
      %v572 = vrot.slane %v557, %v571
      %v573 = vmul.f32 %v563, %v568
      %v574 = vmul.f32 %v563, %v572
      %v575 = vadd.f32 %v534, %v573
      %v576 = vadd.f32 %v535, %v574
      %s577 = scalar_lea.vmem %s2, 104
      %v578 = vld [vmem:[%s577] sm:$0xff]
      %580 = vset.pattern.permute.xlu0 0
      %581 = vperm.xlu0 %580, %v578
      %v582 = vpop.permute.xlu0 %581
      %v584 = vlaneseq
      %v585 = vshrl.u32 %v584, 7
      %v586 = vsub.s32 1, %v585
      %v587 = vrot.slane %v556, %v586
      %v588 = vlaneseq
      %v589 = vshrl.u32 %v588, 7
      %v590 = vsub.s32 1, %v589
      %v591 = vrot.slane %v557, %v590
      %v592 = vmul.f32 %v582, %v587
      %v593 = vmul.f32 %v582, %v591
      %v594 = vadd.f32 %v575, %v592
      %v595 = vadd.f32 %v576, %v593
      %s596 = scalar_lea.vmem %s2, 112
      %v597 = vld [vmem:[%s596] sm:$0xff]
      %599 = vset.pattern.permute.xlu0 0
      %600 = vperm.xlu0 %599, %v597
      %v601 = vpop.permute.xlu0 %600
      %v603 = vlaneseq
      %v604 = vshrl.u32 %v603, 7
      %v605 = vsub.s32 2, %v604
      %v606 = vrot.slane %v556, %v605
      %v607 = vlaneseq
      %v608 = vshrl.u32 %v607, 7
      %v609 = vsub.s32 2, %v608
      %v610 = vrot.slane %v557, %v609
      %v611 = vmul.f32 %v601, %v606
      %v612 = vmul.f32 %v601, %v610
      %v613 = vadd.f32 %v594, %v611
      %v614 = vadd.f32 %v595, %v612
      %s615 = scalar_lea.vmem %s2, 120
      %v616 = vld [vmem:[%s615] sm:$0xff]
      %618 = vset.pattern.permute.xlu0 0
      %619 = vperm.xlu0 %618, %v616
      %v620 = vpop.permute.xlu0 %619
      %v622 = vlaneseq
      %v623 = vshrl.u32 %v622, 7
      %v624 = vsub.s32 3, %v623
      %v625 = vrot.slane %v556, %v624
      %v626 = vlaneseq
      %v627 = vshrl.u32 %v626, 7
      %v628 = vsub.s32 3, %v627
      %v629 = vrot.slane %v557, %v628
      %v630 = vmul.f32 %v620, %v625
      %v631 = vmul.f32 %v620, %v629
      %v632 = vadd.f32 %v613, %v630
      %v633 = vadd.f32 %v614, %v631
      %s634 = scalar_lea.vmem %s2, 128
      %v635 = vld [vmem:[%s634] sm:$0xff]
      %637 = vset.pattern.permute.xlu0 0
      %638 = vperm.xlu0 %637, %v635
      %v639 = vpop.permute.xlu0 %638
      %v641 = vlaneseq
      %v642 = vshrl.u32 %v641, 7
      %v643 = vsub.s32 0, %v642
      %v644 = vrot.slane %v238, %v643
      %v645 = vlaneseq
      %v646 = vshrl.u32 %v645, 7
      %v647 = vsub.s32 4, %v646
      %v648 = vrot.slane %v238, %v647
      %v651 = vlaneseq
      %v652 = vshrl.u32 %v651, 7
      %v653 = vsub.s32 0, %v652
      %v654 = vrot.slane %v644, %v653
      %v655 = vlaneseq
      %v656 = vshrl.u32 %v655, 7
      %v657 = vsub.s32 0, %v656
      %v658 = vrot.slane %v648, %v657
      %v659 = vmul.f32 %v639, %v654
      %v660 = vmul.f32 %v639, %v658
      %v661 = vadd.f32 %v632, %v659
      %v662 = vadd.f32 %v633, %v660
      %s663 = scalar_lea.vmem %s2, 136
      %v664 = vld [vmem:[%s663] sm:$0xff]
      %666 = vset.pattern.permute.xlu0 0
      %667 = vperm.xlu0 %666, %v664
      %v668 = vpop.permute.xlu0 %667
      %v670 = vlaneseq
      %v671 = vshrl.u32 %v670, 7
      %v672 = vsub.s32 1, %v671
      %v673 = vrot.slane %v238, %v672
      %v674 = vlaneseq
      %v675 = vshrl.u32 %v674, 7
      %v676 = vsub.s32 5, %v675
      %v677 = vrot.slane %v238, %v676
      %v680 = vlaneseq
      %v681 = vshrl.u32 %v680, 7
      %v682 = vsub.s32 1, %v681
      %v683 = vrot.slane %v673, %v682
      %v684 = vlaneseq
      %v685 = vshrl.u32 %v684, 7
      %v686 = vsub.s32 1, %v685
      %v687 = vrot.slane %v677, %v686
      %v688 = vmul.f32 %v668, %v683
      %v689 = vmul.f32 %v668, %v687
      %v690 = vadd.f32 %v661, %v688
      %v691 = vadd.f32 %v662, %v689
      %s692 = scalar_lea.vmem %s2, 144
      %v693 = vld [vmem:[%s692] sm:$0xff]
      %695 = vset.pattern.permute.xlu0 0
      %696 = vperm.xlu0 %695, %v693
      %v697 = vpop.permute.xlu0 %696
      %v699 = vlaneseq
      %v700 = vshrl.u32 %v699, 7
      %v701 = vsub.s32 2, %v700
      %v702 = vrot.slane %v238, %v701
      %v703 = vlaneseq
      %v704 = vshrl.u32 %v703, 7
      %v705 = vsub.s32 6, %v704
      %v706 = vrot.slane %v238, %v705
      %v709 = vlaneseq
      %v710 = vshrl.u32 %v709, 7
      %v711 = vsub.s32 2, %v710
      %v712 = vrot.slane %v702, %v711
      %v713 = vlaneseq
      %v714 = vshrl.u32 %v713, 7
      %v715 = vsub.s32 2, %v714
      %v716 = vrot.slane %v706, %v715
      %v717 = vmul.f32 %v697, %v712
      %v718 = vmul.f32 %v697, %v716
      %v719 = vadd.f32 %v690, %v717
      %v720 = vadd.f32 %v691, %v718
      %s721 = scalar_lea.vmem %s2, 152
      %v722 = vld [vmem:[%s721] sm:$0xff]
      %724 = vset.pattern.permute.xlu0 0
      %725 = vperm.xlu0 %724, %v722
      %v726 = vpop.permute.xlu0 %725
      %v728 = vlaneseq
      %v729 = vshrl.u32 %v728, 7
      %v730 = vsub.s32 3, %v729
      %v731 = vrot.slane %v238, %v730
      %v732 = vlaneseq
      %v733 = vshrl.u32 %v732, 7
      %v734 = vsub.s32 7, %v733
      %v735 = vrot.slane %v238, %v734
      %v738 = vlaneseq
      %v739 = vshrl.u32 %v738, 7
      %v740 = vsub.s32 3, %v739
      %v741 = vrot.slane %v731, %v740
      %v742 = vlaneseq
      %v743 = vshrl.u32 %v742, 7
      %v744 = vsub.s32 3, %v743
      %v745 = vrot.slane %v735, %v744
      %v746 = vmul.f32 %v726, %v741
      %v747 = vmul.f32 %v726, %v745
      %v748 = vadd.f32 %v719, %v746
      %v749 = vadd.f32 %v720, %v747
      %750 = vrot.lane.b32.xlu0 %v238, 127
      %v751 = vpop.permute.xlu0 %750
      %752 = vrot.lane.b32.xlu0 %v240, 127
      %v753 = vpop.permute.xlu0 %752
      %vm754 = vcmp.lt.s32.totalorder %v247, 127
      %v755 = vsel %vm754, %v751, %v753
      %v756 = vsel %vm754, %v753, %v751
      %s757 = scalar_lea.vmem %s1, 5
      %v758 = vld [vmem:[%s757] ss:$8 sm:$0x3]
      %v760 = vlaneseq
      %v761 = vshrl.u32 %v760, 7
      %v762 = vsub.s32 0, %v761
      %v763 = vrot.slane %v758, %v762
      %v764 = vlaneseq
      %v765 = vshrl.u32 %v764, 7
      %v766 = vsub.s32 1, %v765
      %v767 = vrot.slane %v758, %v766
      %v770 = vmul.f32 %v755, %v763
      %v771 = vmul.f32 %v756, %v767
      %s772 = scalar_lea.vmem %s2, 160
      %v773 = vld [vmem:[%s772] sm:$0xff]
      %775 = vset.pattern.permute.xlu0 0
      %776 = vperm.xlu0 %775, %v773
      %v777 = vpop.permute.xlu0 %776
      %v779 = vlaneseq
      %v780 = vshrl.u32 %v779, 7
      %v781 = vsub.s32 0, %v780
      %v782 = vrot.slane %v770, %v781
      %v783 = vlaneseq
      %v784 = vshrl.u32 %v783, 7
      %v785 = vsub.s32 0, %v784
      %v786 = vrot.slane %v771, %v785
      %v787 = vmul.f32 %v777, %v782
      %v788 = vmul.f32 %v777, %v786
      %v789 = vadd.f32 %v748, %v787
      %v790 = vadd.f32 %v749, %v788
      %s791 = scalar_lea.vmem %s2, 168
      %v792 = vld [vmem:[%s791] sm:$0xff]
      %794 = vset.pattern.permute.xlu0 0
      %795 = vperm.xlu0 %794, %v792
      %v796 = vpop.permute.xlu0 %795
      %v798 = vlaneseq
      %v799 = vshrl.u32 %v798, 7
      %v800 = vsub.s32 1, %v799
      %v801 = vrot.slane %v770, %v800
      %v802 = vlaneseq
      %v803 = vshrl.u32 %v802, 7
      %v804 = vsub.s32 1, %v803
      %v805 = vrot.slane %v771, %v804
      %v806 = vmul.f32 %v796, %v801
      %v807 = vmul.f32 %v796, %v805
      %v808 = vadd.f32 %v789, %v806
      %v809 = vadd.f32 %v790, %v807
      %s810 = scalar_lea.vmem %s2, 176
      %v811 = vld [vmem:[%s810] sm:$0xff]
      %813 = vset.pattern.permute.xlu0 0
      %814 = vperm.xlu0 %813, %v811
      %v815 = vpop.permute.xlu0 %814
      %v817 = vlaneseq
      %v818 = vshrl.u32 %v817, 7
      %v819 = vsub.s32 2, %v818
      %v820 = vrot.slane %v770, %v819
      %v821 = vlaneseq
      %v822 = vshrl.u32 %v821, 7
      %v823 = vsub.s32 2, %v822
      %v824 = vrot.slane %v771, %v823
      %v825 = vmul.f32 %v815, %v820
      %v826 = vmul.f32 %v815, %v824
      %v827 = vadd.f32 %v808, %v825
      %v828 = vadd.f32 %v809, %v826
      %s829 = scalar_lea.vmem %s2, 184
      %v830 = vld [vmem:[%s829] sm:$0xff]
      %832 = vset.pattern.permute.xlu0 0
      %833 = vperm.xlu0 %832, %v830
      %v834 = vpop.permute.xlu0 %833
      %v836 = vlaneseq
      %v837 = vshrl.u32 %v836, 7
      %v838 = vsub.s32 3, %v837
      %v839 = vrot.slane %v770, %v838
      %v840 = vlaneseq
      %v841 = vshrl.u32 %v840, 7
      %v842 = vsub.s32 3, %v841
      %v843 = vrot.slane %v771, %v842
      %v844 = vmul.f32 %v834, %v839
      %v845 = vmul.f32 %v834, %v843
      %v846 = vadd.f32 %v827, %v844
      %v847 = vadd.f32 %v828, %v845
      %848 = vrot.lane.b32.xlu0 %v238, 113
      %v849 = vpop.permute.xlu0 %848
      %850 = vrot.lane.b32.xlu0 %v240, 113
      %v851 = vpop.permute.xlu0 %850
      %vm852 = vcmp.lt.s32.totalorder %v247, 113
      %v853 = vsel %vm852, %v849, %v851
      %v854 = vsel %vm852, %v851, %v849
      %s855 = scalar_lea.vmem %s1, 6
      %v856 = vld [vmem:[%s855] ss:$8 sm:$0x3]
      %v858 = vlaneseq
      %v859 = vshrl.u32 %v858, 7
      %v860 = vsub.s32 0, %v859
      %v861 = vrot.slane %v856, %v860
      %v862 = vlaneseq
      %v863 = vshrl.u32 %v862, 7
      %v864 = vsub.s32 1, %v863
      %v865 = vrot.slane %v856, %v864
      %v868 = vmul.f32 %v853, %v861
      %v869 = vmul.f32 %v854, %v865
      %s870 = scalar_lea.vmem %s2, 192
      %v871 = vld [vmem:[%s870] sm:$0xff]
      %873 = vset.pattern.permute.xlu0 0
      %874 = vperm.xlu0 %873, %v871
      %v875 = vpop.permute.xlu0 %874
      %v877 = vlaneseq
      %v878 = vshrl.u32 %v877, 7
      %v879 = vsub.s32 0, %v878
      %v880 = vrot.slane %v868, %v879
      %v881 = vlaneseq
      %v882 = vshrl.u32 %v881, 7
      %v883 = vsub.s32 0, %v882
      %v884 = vrot.slane %v869, %v883
      %v885 = vmul.f32 %v875, %v880
      %v886 = vmul.f32 %v875, %v884
      %v887 = vadd.f32 %v846, %v885
      %v888 = vadd.f32 %v847, %v886
      %s889 = scalar_lea.vmem %s2, 200
      %v890 = vld [vmem:[%s889] sm:$0xff]
      %892 = vset.pattern.permute.xlu0 0
      %893 = vperm.xlu0 %892, %v890
      %v894 = vpop.permute.xlu0 %893
      %v896 = vlaneseq
      %v897 = vshrl.u32 %v896, 7
      %v898 = vsub.s32 1, %v897
      %v899 = vrot.slane %v868, %v898
      %v900 = vlaneseq
      %v901 = vshrl.u32 %v900, 7
      %v902 = vsub.s32 1, %v901
      %v903 = vrot.slane %v869, %v902
      %v904 = vmul.f32 %v894, %v899
      %v905 = vmul.f32 %v894, %v903
      %v906 = vadd.f32 %v887, %v904
      %v907 = vadd.f32 %v888, %v905
      %s908 = scalar_lea.vmem %s2, 208
      %v909 = vld [vmem:[%s908] sm:$0xff]
      %911 = vset.pattern.permute.xlu0 0
      %912 = vperm.xlu0 %911, %v909
      %v913 = vpop.permute.xlu0 %912
      %v915 = vlaneseq
      %v916 = vshrl.u32 %v915, 7
      %v917 = vsub.s32 2, %v916
      %v918 = vrot.slane %v868, %v917
      %v919 = vlaneseq
      %v920 = vshrl.u32 %v919, 7
      %v921 = vsub.s32 2, %v920
      %v922 = vrot.slane %v869, %v921
      %v923 = vmul.f32 %v913, %v918
      %v924 = vmul.f32 %v913, %v922
      %v925 = vadd.f32 %v906, %v923
      %v926 = vadd.f32 %v907, %v924
      %s927 = scalar_lea.vmem %s2, 216
      %v928 = vld [vmem:[%s927] sm:$0xff]
      %930 = vset.pattern.permute.xlu0 0
      %931 = vperm.xlu0 %930, %v928
      %v932 = vpop.permute.xlu0 %931
      %v934 = vlaneseq
      %v935 = vshrl.u32 %v934, 7
      %v936 = vsub.s32 3, %v935
      %v937 = vrot.slane %v868, %v936
      %v938 = vlaneseq
      %v939 = vshrl.u32 %v938, 7
      %v940 = vsub.s32 3, %v939
      %v941 = vrot.slane %v869, %v940
      %v942 = vmul.f32 %v932, %v937
      %v943 = vmul.f32 %v932, %v941
      %v944 = vadd.f32 %v925, %v942
      %v945 = vadd.f32 %v926, %v943
      %946 = vrot.lane.b32.xlu0 %v238, 112
      %v947 = vpop.permute.xlu0 %946
      %948 = vrot.lane.b32.xlu0 %v240, 112
      %v949 = vpop.permute.xlu0 %948
      %vm950 = vcmp.lt.s32.totalorder %v247, 112
      %v951 = vsel %vm950, %v947, %v949
      %v952 = vsel %vm950, %v949, %v947
      %s953 = scalar_lea.vmem %s1, 7
      %v954 = vld [vmem:[%s953] ss:$8 sm:$0x3]
      %v956 = vlaneseq
      %v957 = vshrl.u32 %v956, 7
      %v958 = vsub.s32 0, %v957
      %v959 = vrot.slane %v954, %v958
      %v960 = vlaneseq
      %v961 = vshrl.u32 %v960, 7
      %v962 = vsub.s32 1, %v961
      %v963 = vrot.slane %v954, %v962
      %v966 = vmul.f32 %v951, %v959
      %v967 = vmul.f32 %v952, %v963
      %s968 = scalar_lea.vmem %s2, 224
      %v969 = vld [vmem:[%s968] sm:$0xff]
      %971 = vset.pattern.permute.xlu0 0
      %972 = vperm.xlu0 %971, %v969
      %v973 = vpop.permute.xlu0 %972
      %v975 = vlaneseq
      %v976 = vshrl.u32 %v975, 7
      %v977 = vsub.s32 0, %v976
      %v978 = vrot.slane %v966, %v977
      %v979 = vlaneseq
      %v980 = vshrl.u32 %v979, 7
      %v981 = vsub.s32 0, %v980
      %v982 = vrot.slane %v967, %v981
      %v983 = vmul.f32 %v973, %v978
      %v984 = vmul.f32 %v973, %v982
      %v985 = vadd.f32 %v944, %v983
      %v986 = vadd.f32 %v945, %v984
      %s987 = scalar_lea.vmem %s2, 232
      %v988 = vld [vmem:[%s987] sm:$0xff]
      %990 = vset.pattern.permute.xlu0 0
      %991 = vperm.xlu0 %990, %v988
      %v992 = vpop.permute.xlu0 %991
      %v994 = vlaneseq
      %v995 = vshrl.u32 %v994, 7
      %v996 = vsub.s32 1, %v995
      %v997 = vrot.slane %v966, %v996
      %v998 = vlaneseq
      %v999 = vshrl.u32 %v998, 7
      %v1000 = vsub.s32 1, %v999
      %v1001 = vrot.slane %v967, %v1000
      %v1002 = vmul.f32 %v992, %v997
      %v1003 = vmul.f32 %v992, %v1001
      %v1004 = vadd.f32 %v985, %v1002
      %v1005 = vadd.f32 %v986, %v1003
      %s1006 = scalar_lea.vmem %s2, 240
      %v1007 = vld [vmem:[%s1006] sm:$0xff]
      %1009 = vset.pattern.permute.xlu0 0
      %1010 = vperm.xlu0 %1009, %v1007
      %v1011 = vpop.permute.xlu0 %1010
      %v1013 = vlaneseq
      %v1014 = vshrl.u32 %v1013, 7
      %v1015 = vsub.s32 2, %v1014
      %v1016 = vrot.slane %v966, %v1015
      %v1017 = vlaneseq
      %v1018 = vshrl.u32 %v1017, 7
      %v1019 = vsub.s32 2, %v1018
      %v1020 = vrot.slane %v967, %v1019
      %v1021 = vmul.f32 %v1011, %v1016
      %v1022 = vmul.f32 %v1011, %v1020
      %v1023 = vadd.f32 %v1004, %v1021
      %v1024 = vadd.f32 %v1005, %v1022
      %s1025 = scalar_lea.vmem %s2, 248
      %v1026 = vld [vmem:[%s1025] sm:$0xff]
      %1028 = vset.pattern.permute.xlu0 0
      %1029 = vperm.xlu0 %1028, %v1026
      %v1030 = vpop.permute.xlu0 %1029
      %v1032 = vlaneseq
      %v1033 = vshrl.u32 %v1032, 7
      %v1034 = vsub.s32 3, %v1033
      %v1035 = vrot.slane %v966, %v1034
      %v1036 = vlaneseq
      %v1037 = vshrl.u32 %v1036, 7
      %v1038 = vsub.s32 3, %v1037
      %v1039 = vrot.slane %v967, %v1038
      %v1040 = vmul.f32 %v1030, %v1035
      %v1041 = vmul.f32 %v1030, %v1039
      %v1042 = vadd.f32 %v1023, %v1040
      %v1043 = vadd.f32 %v1024, %v1041
      %1044 = vrot.lane.b32.xlu0 %v238, 111
      %v1045 = vpop.permute.xlu0 %1044
      %1046 = vrot.lane.b32.xlu0 %v240, 111
      %v1047 = vpop.permute.xlu0 %1046
      %vm1048 = vcmp.lt.s32.totalorder %v247, 111
      %v1049 = vsel %vm1048, %v1045, %v1047
      %v1050 = vsel %vm1048, %v1047, %v1045
      %s1051 = scalar_lea.vmem %s1, 16
      %v1052 = vld [vmem:[%s1051] ss:$8 sm:$0x3]
      %v1054 = vlaneseq
      %v1055 = vshrl.u32 %v1054, 7
      %v1056 = vsub.s32 0, %v1055
      %v1057 = vrot.slane %v1052, %v1056
      %v1058 = vlaneseq
      %v1059 = vshrl.u32 %v1058, 7
      %v1060 = vsub.s32 1, %v1059
      %v1061 = vrot.slane %v1052, %v1060
      %v1064 = vmul.f32 %v1049, %v1057
      %v1065 = vmul.f32 %v1050, %v1061
      %s1066 = scalar_lea.vmem %s2, 256
      %v1067 = vld [vmem:[%s1066] sm:$0xff]
      %1069 = vset.pattern.permute.xlu0 0
      %1070 = vperm.xlu0 %1069, %v1067
      %v1071 = vpop.permute.xlu0 %1070
      %v1073 = vlaneseq
      %v1074 = vshrl.u32 %v1073, 7
      %v1075 = vsub.s32 0, %v1074
      %v1076 = vrot.slane %v1064, %v1075
      %v1077 = vlaneseq
      %v1078 = vshrl.u32 %v1077, 7
      %v1079 = vsub.s32 0, %v1078
      %v1080 = vrot.slane %v1065, %v1079
      %v1081 = vmul.f32 %v1071, %v1076
      %v1082 = vmul.f32 %v1071, %v1080
      %v1083 = vadd.f32 %v1042, %v1081
      %v1084 = vadd.f32 %v1043, %v1082
      %s1085 = scalar_lea.vmem %s2, 264
      %v1086 = vld [vmem:[%s1085] sm:$0xff]
      %1088 = vset.pattern.permute.xlu0 0
      %1089 = vperm.xlu0 %1088, %v1086
      %v1090 = vpop.permute.xlu0 %1089
      %v1092 = vlaneseq
      %v1093 = vshrl.u32 %v1092, 7
      %v1094 = vsub.s32 1, %v1093
      %v1095 = vrot.slane %v1064, %v1094
      %v1096 = vlaneseq
      %v1097 = vshrl.u32 %v1096, 7
      %v1098 = vsub.s32 1, %v1097
      %v1099 = vrot.slane %v1065, %v1098
      %v1100 = vmul.f32 %v1090, %v1095
      %v1101 = vmul.f32 %v1090, %v1099
      %v1102 = vadd.f32 %v1083, %v1100
      %v1103 = vadd.f32 %v1084, %v1101
      %s1104 = scalar_lea.vmem %s2, 272
      %v1105 = vld [vmem:[%s1104] sm:$0xff]
      %1107 = vset.pattern.permute.xlu0 0
      %1108 = vperm.xlu0 %1107, %v1105
      %v1109 = vpop.permute.xlu0 %1108
      %v1111 = vlaneseq
      %v1112 = vshrl.u32 %v1111, 7
      %v1113 = vsub.s32 2, %v1112
      %v1114 = vrot.slane %v1064, %v1113
      %v1115 = vlaneseq
      %v1116 = vshrl.u32 %v1115, 7
      %v1117 = vsub.s32 2, %v1116
      %v1118 = vrot.slane %v1065, %v1117
      %v1119 = vmul.f32 %v1109, %v1114
      %v1120 = vmul.f32 %v1109, %v1118
      %v1121 = vadd.f32 %v1102, %v1119
      %v1122 = vadd.f32 %v1103, %v1120
      %s1123 = scalar_lea.vmem %s2, 280
      %v1124 = vld [vmem:[%s1123] sm:$0xff]
      %1126 = vset.pattern.permute.xlu0 0
      %1127 = vperm.xlu0 %1126, %v1124
      %v1128 = vpop.permute.xlu0 %1127
      %v1130 = vlaneseq
      %v1131 = vshrl.u32 %v1130, 7
      %v1132 = vsub.s32 3, %v1131
      %v1133 = vrot.slane %v1064, %v1132
      %v1134 = vlaneseq
      %v1135 = vshrl.u32 %v1134, 7
      %v1136 = vsub.s32 3, %v1135
      %v1137 = vrot.slane %v1065, %v1136
      %v1138 = vmul.f32 %v1128, %v1133
      %v1139 = vmul.f32 %v1128, %v1137
      %v1140 = vadd.f32 %v1121, %v1138
      %v1141 = vadd.f32 %v1122, %v1139
      %v1142 = vld [vmem:[%s3] sm:$0xff]
      %1144 = vset.pattern.permute.xlu0 0
      %1145 = vperm.xlu0 %1144, %v1142
      %v1146 = vpop.permute.xlu0 %1145
      %v1148 = vadd.f32 %v1140, %v1146
      %v1149 = vadd.f32 %v1141, %v1146
      %1150 = vst [vmem:[%s232] sm:$0xff] %v1148
      %1151 = vst [vmem:[%s232 + $0x8] sm:$0xff] %v1149
      %v1152 = vadd.f32 %v1148, %v1149
      %1153 = vadd.xlane.f32.xlu0 %v1152
      %v1154 = vpop.xlane.xlu0 %1153
      %vm1155 = vcmask 7168
      %1156 = vst.msk [vmem:[%s237] sm:$0xff] %vm1155, %v1154
      %v1157 = vmul.f32 %v1148, %v1148
      %v1158 = vmul.f32 %v1149, %v1149
      %v1159 = vadd.f32 %v1157, %v1158
      %1160 = vadd.xlane.f32.xlu0 %v1159
      %v1161 = vpop.xlane.xlu0 %1160
      %s1162 = scalar_lea.vmem %s237, 8
      %1163 = vst.msk [vmem:[%s1162] sm:$0xff] %vm1155, %v1161
      %p1164 = scmp.lt.s32.totalorder %s17, 1
      %s1165 = scalar_select %p1164, %s17, 1
      %s1166 = smul.addr %s1165, 2
      %s1167 = smul.addr %s1166, 8
      %s1168 = scalar_lea.vmem %s4, %s1167
      %p1169 = scmp.lt.s32.totalorder %s17, 1
      %s1170 = scalar_select %p1169, %s17, 1
      %s1171 = smul.addr %s1170, 2
      %s1172 = smul.addr %s1171, 8
      %s1173 = scalar_lea.vmem %s5, %s1172
      // Predicated region
      $region37: #{fcb_forward.2} parent=35 // pred_check
        %p1174 = pneg %p124
      $region38: #{fcb_forward.2} parent=35 // pred_check_branch
        %1176 = sbr.rel (%p1174) target = $region40
      $region39: #{fcb_forward.2} parent=35 // pred_region
        _
      $region40: #{fcb_forward.2} parent=35 // pred_fallthru
        _
      // Predicated region
      $region41: #{fcb_forward.2} parent=35 // pred_check
        %p1177 = pneg %p150
      $region42: #{fcb_forward.2} parent=35 // pred_check_branch
        %1179 = sbr.rel (%p1177) target = $region44
      $region43: #{fcb_forward.2} parent=35 // pred_region
        _
      $region44: #{fcb_forward.2} parent=35 // pred_fallthru
        _
    $region36: #{fcb_forward.2} parent=5 // pred_fallthru
      _
    %p1180 = scmp.le.s32.totalorder 2, %s12
    // Predicated region
    $region45: #{fcb_forward.2} parent=5 // pred_check
      %p1181 = pneg %p1180
    $region46: #{fcb_forward.2} parent=5 // pred_check_branch
      %1183 = sbr.rel (%p1181) target = $region48
    $region47: #{fcb_forward.2} parent=5 // pred_region
      %s1184 = ssub.s32 %s12, 2
      // Predicated region
      $region49: #{fcb_forward.2} parent=47 // pred_check
        %p1185 = pneg %p130
      $region50: #{fcb_forward.2} parent=47 // pred_check_branch
        %1187 = sbr.rel (%p1185) target = $region52
      $region51: #{fcb_forward.2} parent=47 // pred_region
        %p1188 = scmp.lt.s32.totalorder %s18, 1
        %s1189 = scalar_select %p1188, %s18, 1
        %s1190 = smul.addr %s1189, 2
        %s1191 = smul.addr %s1190, 8
        %s1192 = scalar_lea.vmem %s4, %s1191
      $region52: #{fcb_forward.2} parent=47 // pred_fallthru
        _
      // Predicated region
      $region53: #{fcb_forward.2} parent=47 // pred_check
        %p1193 = pneg %p156
      $region54: #{fcb_forward.2} parent=47 // pred_check_branch
        %1195 = sbr.rel (%p1193) target = $region56
      $region55: #{fcb_forward.2} parent=47 // pred_region
        %p1196 = scmp.lt.s32.totalorder %s18, 1
        %s1197 = scalar_select %p1196, %s18, 1
        %s1198 = smul.addr %s1197, 2
        %s1199 = smul.addr %s1198, 8
        %s1200 = scalar_lea.vmem %s5, %s1199
      $region56: #{fcb_forward.2} parent=47 // pred_fallthru
        _
    $region48: #{fcb_forward.2} parent=5 // pred_fallthru
      _
  $region6: #{fcb_forward.2} parent=0 // loop_footer
    %s16 = sadd.s32 1, %s12
  $region7: #{fcb_forward.2} parent=0 // loop_footer_branch
    %11 = sbr.rel target = $region3
  $region8: #{fcb_forward.2} parent=0 // loop_exit
    _

</llo_original>
